<compile_context>
chip_gen: v7x
topology: tpu7x:2x2x1
jax: 0.10.0
libtpu: 0.0.40
codegen_flags: <defaults>
</compile_context>

<pallas_src>
import jax
import jax.numpy as jnp
import numpy as np
from jax.experimental import pallas as pl
from jax.experimental.pallas import tpu as pltpu


def _fused_mlp_kernel(x_ref, w_ref, out_ref, stds_ref):
    """Whole MLP in one invocation.

    x_ref:    (B, N)    f32 VMEM
    w_ref:    (L, N, N) f32 VMEM  (each layer already transposed to (in, out))
    out_ref:  (B, N)    f32 VMEM  -> final-layer activation
    stds_ref: (L,)      f32 SMEM  -> per-layer unbiased std (torch.Tensor.std())
    """
    B, N = x_ref.shape
    L = w_ref.shape[0]
    n = float(B * N)

    acc = x_ref[...].astype(jnp.float32)

    # L is tiny and static: unroll the layer loop in Python (static weight indices).
    for l in range(L):
        y = jnp.dot(
            acc,
            w_ref[l],
            preferred_element_type=jnp.float32,
            precision=jax.lax.Precision.HIGHEST,
        )                              # MXU
        y = jnp.maximum(y, 0.0)        # VPU ReLU

        # Unbiased std over all B*N elements (matches torch.Tensor.std()).
        # Keep the reduction in the vector domain; extract scalar only for the SMEM store.
        mean = jnp.sum(y, keepdims=True) / n                      # (1, 1)
        d = y - mean
        var = jnp.sum(d * d, keepdims=True) / (n - 1.0)           # (1, 1)
        std = jnp.sqrt(var)                                       # (1, 1), EUP
        stds_ref[l] = std[0, 0]

        acc = y

    out_ref[...] = acc.astype(out_ref.dtype)


def mlp_pallas(x, w_t_stacked):
    """x: (B, N) f32; w_t_stacked: (L, N, N), each layer transposed to (in, out)."""
    B, N = x.shape
    L = w_t_stacked.shape[0]
    return pl.pallas_call(
        _fused_mlp_kernel,
        out_shape=(
            jax.ShapeDtypeStruct((B, N), x.dtype),   # final activation
            jax.ShapeDtypeStruct((L,), jnp.float32),  # per-layer std
        ),
        in_specs=[
            pl.BlockSpec(memory_space=pltpu.MemorySpace.VMEM),  # activations (B, N)
            pl.BlockSpec(memory_space=pltpu.MemorySpace.VMEM),  # full weight stack (L, N, N), 256 KiB
        ],
        out_specs=(
            pl.BlockSpec(memory_space=pltpu.MemorySpace.VMEM),
            pl.BlockSpec(memory_space=pltpu.MemorySpace.SMEM),
        ),
    )(x, w_t_stacked)


@jax.jit
def mlp_forward(x, w_t_stacked):
    """Single fused dispatch: returns (final activation, per-layer unbiased std)."""
    return mlp_pallas(x, w_t_stacked)


def kaiming_normal(key, shape):
    # torch.nn.init.kaiming_normal_ defaults: mode='fan_in', a=0, leaky_relu
    # -> gain = sqrt(2), std = sqrt(2 / fan_in). nn.Linear weight is (out, in) => fan_in = shape[1].
    fan_in = shape[1]
    std = (2.0 / fan_in) ** 0.5
    return std * jax.random.normal(key, shape, dtype=jnp.float32)


if __name__ == "__main__":
    neural_num = 128   # lane-aligned (multiple of 128)
    layers = 4
    batch = 8          # sublane-aligned; workload is latency-bound at this size

    key = jax.random.PRNGKey(0)
    k_x, *k_ws = jax.random.split(key, layers + 1)

    # MLP.initialize(): kaiming_normal_ on every (out, in) Linear weight,
    # then pre-transpose ONCE to (in, out) and stack to (L, N, N).
    weights = [kaiming_normal(k, (neural_num, neural_num)) for k in k_ws]
    w_t_stacked = jnp.stack([w.T for w in weights], axis=0)

    x = jax.random.normal(k_x, (batch, neural_num), dtype=jnp.float32)

    out, stds = mlp_forward(x, w_t_stacked)
    jax.block_until_ready((out, stds))

    # Host-side reporting after ONE device->host transfer: matches the original
    # per-layer "print std / break on NaN" behaviour without per-layer syncs.
    # TODO(synk): the original breaks the *compute* loop on the first NaN layer; the
    # fused kernel always runs all layers (a NaN simply propagates to later layers).
    for i, s in enumerate(np.asarray(jax.device_get(stds))):
        print(f"layer: {i}, std: {float(s)}")
        if np.isnan(s):
            print(f"output is nan in {i} layers.")
            break

    print("KERNEL_OK")
</pallas_src>

<mosaic_0001>
module attributes {stable_mosaic.version = 11 : i64} {
  func.func @_fused_mlp_kernel(%arg0: memref<8x128xf32, #tpu.memory_space<vmem>>, %arg1: memref<4x128x128xf32, #tpu.memory_space<vmem>>, %arg2: memref<8x128xf32, #tpu.memory_space<vmem>>, %arg3: memref<4xf32, #tpu.memory_space<smem>>) attributes {dimension_semantics = [], scalar_prefetch = 0 : i64, scratch_operands = 0 : i64, tpu.core_type = #tpu.core_type<tc>} {
    %c0 = arith.constant 0 : index
    %c0_0 = arith.constant 0 : index
    %0 = vector.load %arg0[%c0, %c0_0] : memref<8x128xf32, #tpu.memory_space<vmem>>, vector<8x128xf32>
    %c0_1 = arith.constant 0 : index
    %c0_2 = arith.constant 0 : index
    %c0_3 = arith.constant 0 : index
    %1 = vector.load %arg1[%c0_1, %c0_2, %c0_3] : memref<4x128x128xf32, #tpu.memory_space<vmem>>, vector<1x128x128xf32>
    %2 = vector.shape_cast %1 : vector<1x128x128xf32> to vector<128x128xf32>
    %cst = arith.constant dense<0.000000e+00> : vector<8x128xf32>
    %3 = tpu.matmul %0, %2, %cst {dimension_numbers = #tpu.dot_dimension_numbers<[1], [0], [0], [1], [0, 0, 1, 1], [], []>, precision = #tpu.contract_precision<fp32>} : vector<8x128xf32>, vector<128x128xf32>, vector<8x128xf32> -> vector<8x128xf32>
    %cst_4 = arith.constant 0.000000e+00 : f32
    %4 = vector.broadcast %cst_4 : f32 to vector<8x128xf32>
    %5 = arith.maximumf %3, %4 : vector<8x128xf32>
    %6 = vector.shape_cast %5 : vector<8x128xf32> to vector<1x8x128xf32>
    %cst_5 = arith.constant dense<0.000000e+00> : vector<1xf32>
    %7 = vector.multi_reduction <add>, %6, %cst_5 [1, 2] : vector<1x8x128xf32> to vector<1xf32>
    %8 = vector.shape_cast %7 : vector<1xf32> to vector<1x1x1xf32>
    %9 = vector.extract %8[0, 0, 0] : f32 from vector<1x1x1xf32>
    %10 = vector.broadcast %9 : f32 to vector<1x1xf32>
    %cst_6 = arith.constant 1.024000e+03 : f32
    %11 = vector.broadcast %cst_6 : f32 to vector<1x1xf32>
    %12 = arith.divf %10, %11 : vector<1x1xf32>
    %13 = vector.broadcast %12 : vector<1x1xf32> to vector<8x128xf32>
    %14 = arith.subf %5, %13 : vector<8x128xf32>
    %15 = arith.mulf %14, %14 : vector<8x128xf32>
    %16 = vector.shape_cast %15 : vector<8x128xf32> to vector<1x8x128xf32>
    %cst_7 = arith.constant dense<0.000000e+00> : vector<1xf32>
    %17 = vector.multi_reduction <add>, %16, %cst_7 [1, 2] : vector<1x8x128xf32> to vector<1xf32>
    %18 = vector.shape_cast %17 : vector<1xf32> to vector<1x1x1xf32>
    %19 = vector.extract %18[0, 0, 0] : f32 from vector<1x1x1xf32>
    %20 = vector.broadcast %19 : f32 to vector<1x1xf32>
    %cst_8 = arith.constant 1.023000e+03 : f32
    %21 = vector.broadcast %cst_8 : f32 to vector<1x1xf32>
    %22 = arith.divf %20, %21 : vector<1x1xf32>
    %23 = math.sqrt %22 : vector<1x1xf32>
    %24 = vector.extract %23[0, 0] : f32 from vector<1x1xf32>
    %c0_9 = arith.constant 0 : index
    %25 = memref.load %arg3[%c0_9] : memref<4xf32, #tpu.memory_space<smem>>
    memref.store %24, %arg3[%c0_9] : memref<4xf32, #tpu.memory_space<smem>>
    %c1 = arith.constant 1 : index
    %c0_10 = arith.constant 0 : index
    %c0_11 = arith.constant 0 : index
    %26 = vector.load %arg1[%c1, %c0_10, %c0_11] : memref<4x128x128xf32, #tpu.memory_space<vmem>>, vector<1x128x128xf32>
    %27 = vector.shape_cast %26 : vector<1x128x128xf32> to vector<128x128xf32>
    %cst_12 = arith.constant dense<0.000000e+00> : vector<8x128xf32>
    %28 = tpu.matmul %5, %27, %cst_12 {dimension_numbers = #tpu.dot_dimension_numbers<[1], [0], [0], [1], [0, 0, 1, 1], [], []>, precision = #tpu.contract_precision<fp32>} : vector<8x128xf32>, vector<128x128xf32>, vector<8x128xf32> -> vector<8x128xf32>
    %cst_13 = arith.constant 0.000000e+00 : f32
    %29 = vector.broadcast %cst_13 : f32 to vector<8x128xf32>
    %30 = arith.maximumf %28, %29 : vector<8x128xf32>
    %31 = vector.shape_cast %30 : vector<8x128xf32> to vector<1x8x128xf32>
    %cst_14 = arith.constant dense<0.000000e+00> : vector<1xf32>
    %32 = vector.multi_reduction <add>, %31, %cst_14 [1, 2] : vector<1x8x128xf32> to vector<1xf32>
    %33 = vector.shape_cast %32 : vector<1xf32> to vector<1x1x1xf32>
    %34 = vector.extract %33[0, 0, 0] : f32 from vector<1x1x1xf32>
    %35 = vector.broadcast %34 : f32 to vector<1x1xf32>
    %cst_15 = arith.constant 1.024000e+03 : f32
    %36 = vector.broadcast %cst_15 : f32 to vector<1x1xf32>
    %37 = arith.divf %35, %36 : vector<1x1xf32>
    %38 = vector.broadcast %37 : vector<1x1xf32> to vector<8x128xf32>
    %39 = arith.subf %30, %38 : vector<8x128xf32>
    %40 = arith.mulf %39, %39 : vector<8x128xf32>
    %41 = vector.shape_cast %40 : vector<8x128xf32> to vector<1x8x128xf32>
    %cst_16 = arith.constant dense<0.000000e+00> : vector<1xf32>
    %42 = vector.multi_reduction <add>, %41, %cst_16 [1, 2] : vector<1x8x128xf32> to vector<1xf32>
    %43 = vector.shape_cast %42 : vector<1xf32> to vector<1x1x1xf32>
    %44 = vector.extract %43[0, 0, 0] : f32 from vector<1x1x1xf32>
    %45 = vector.broadcast %44 : f32 to vector<1x1xf32>
    %cst_17 = arith.constant 1.023000e+03 : f32
    %46 = vector.broadcast %cst_17 : f32 to vector<1x1xf32>
    %47 = arith.divf %45, %46 : vector<1x1xf32>
    %48 = math.sqrt %47 : vector<1x1xf32>
    %49 = vector.extract %48[0, 0] : f32 from vector<1x1xf32>
    %c1_18 = arith.constant 1 : index
    %50 = memref.load %arg3[%c1_18] : memref<4xf32, #tpu.memory_space<smem>>
    memref.store %49, %arg3[%c1_18] : memref<4xf32, #tpu.memory_space<smem>>
    %c2 = arith.constant 2 : index
    %c0_19 = arith.constant 0 : index
    %c0_20 = arith.constant 0 : index
    %51 = vector.load %arg1[%c2, %c0_19, %c0_20] : memref<4x128x128xf32, #tpu.memory_space<vmem>>, vector<1x128x128xf32>
    %52 = vector.shape_cast %51 : vector<1x128x128xf32> to vector<128x128xf32>
    %cst_21 = arith.constant dense<0.000000e+00> : vector<8x128xf32>
    %53 = tpu.matmul %30, %52, %cst_21 {dimension_numbers = #tpu.dot_dimension_numbers<[1], [0], [0], [1], [0, 0, 1, 1], [], []>, precision = #tpu.contract_precision<fp32>} : vector<8x128xf32>, vector<128x128xf32>, vector<8x128xf32> -> vector<8x128xf32>
    %cst_22 = arith.constant 0.000000e+00 : f32
    %54 = vector.broadcast %cst_22 : f32 to vector<8x128xf32>
    %55 = arith.maximumf %53, %54 : vector<8x128xf32>
    %56 = vector.shape_cast %55 : vector<8x128xf32> to vector<1x8x128xf32>
    %cst_23 = arith.constant dense<0.000000e+00> : vector<1xf32>
    %57 = vector.multi_reduction <add>, %56, %cst_23 [1, 2] : vector<1x8x128xf32> to vector<1xf32>
    %58 = vector.shape_cast %57 : vector<1xf32> to vector<1x1x1xf32>
    %59 = vector.extract %58[0, 0, 0] : f32 from vector<1x1x1xf32>
    %60 = vector.broadcast %59 : f32 to vector<1x1xf32>
    %cst_24 = arith.constant 1.024000e+03 : f32
    %61 = vector.broadcast %cst_24 : f32 to vector<1x1xf32>
    %62 = arith.divf %60, %61 : vector<1x1xf32>
    %63 = vector.broadcast %62 : vector<1x1xf32> to vector<8x128xf32>
    %64 = arith.subf %55, %63 : vector<8x128xf32>
    %65 = arith.mulf %64, %64 : vector<8x128xf32>
    %66 = vector.shape_cast %65 : vector<8x128xf32> to vector<1x8x128xf32>
    %cst_25 = arith.constant dense<0.000000e+00> : vector<1xf32>
    %67 = vector.multi_reduction <add>, %66, %cst_25 [1, 2] : vector<1x8x128xf32> to vector<1xf32>
    %68 = vector.shape_cast %67 : vector<1xf32> to vector<1x1x1xf32>
    %69 = vector.extract %68[0, 0, 0] : f32 from vector<1x1x1xf32>
    %70 = vector.broadcast %69 : f32 to vector<1x1xf32>
    %cst_26 = arith.constant 1.023000e+03 : f32
    %71 = vector.broadcast %cst_26 : f32 to vector<1x1xf32>
    %72 = arith.divf %70, %71 : vector<1x1xf32>
    %73 = math.sqrt %72 : vector<1x1xf32>
    %74 = vector.extract %73[0, 0] : f32 from vector<1x1xf32>
    %c2_27 = arith.constant 2 : index
    %75 = memref.load %arg3[%c2_27] : memref<4xf32, #tpu.memory_space<smem>>
    memref.store %74, %arg3[%c2_27] : memref<4xf32, #tpu.memory_space<smem>>
    %c3 = arith.constant 3 : index
    %c0_28 = arith.constant 0 : index
    %c0_29 = arith.constant 0 : index
    %76 = vector.load %arg1[%c3, %c0_28, %c0_29] : memref<4x128x128xf32, #tpu.memory_space<vmem>>, vector<1x128x128xf32>
    %77 = vector.shape_cast %76 : vector<1x128x128xf32> to vector<128x128xf32>
    %cst_30 = arith.constant dense<0.000000e+00> : vector<8x128xf32>
    %78 = tpu.matmul %55, %77, %cst_30 {dimension_numbers = #tpu.dot_dimension_numbers<[1], [0], [0], [1], [0, 0, 1, 1], [], []>, precision = #tpu.contract_precision<fp32>} : vector<8x128xf32>, vector<128x128xf32>, vector<8x128xf32> -> vector<8x128xf32>
    %cst_31 = arith.constant 0.000000e+00 : f32
    %79 = vector.broadcast %cst_31 : f32 to vector<8x128xf32>
    %80 = arith.maximumf %78, %79 : vector<8x128xf32>
    %81 = vector.shape_cast %80 : vector<8x128xf32> to vector<1x8x128xf32>
    %cst_32 = arith.constant dense<0.000000e+00> : vector<1xf32>
    %82 = vector.multi_reduction <add>, %81, %cst_32 [1, 2] : vector<1x8x128xf32> to vector<1xf32>
    %83 = vector.shape_cast %82 : vector<1xf32> to vector<1x1x1xf32>
    %84 = vector.extract %83[0, 0, 0] : f32 from vector<1x1x1xf32>
    %85 = vector.broadcast %84 : f32 to vector<1x1xf32>
    %cst_33 = arith.constant 1.024000e+03 : f32
    %86 = vector.broadcast %cst_33 : f32 to vector<1x1xf32>
    %87 = arith.divf %85, %86 : vector<1x1xf32>
    %88 = vector.broadcast %87 : vector<1x1xf32> to vector<8x128xf32>
    %89 = arith.subf %80, %88 : vector<8x128xf32>
    %90 = arith.mulf %89, %89 : vector<8x128xf32>
    %91 = vector.shape_cast %90 : vector<8x128xf32> to vector<1x8x128xf32>
    %cst_34 = arith.constant dense<0.000000e+00> : vector<1xf32>
    %92 = vector.multi_reduction <add>, %91, %cst_34 [1, 2] : vector<1x8x128xf32> to vector<1xf32>
    %93 = vector.shape_cast %92 : vector<1xf32> to vector<1x1x1xf32>
    %94 = vector.extract %93[0, 0, 0] : f32 from vector<1x1x1xf32>
    %95 = vector.broadcast %94 : f32 to vector<1x1xf32>
    %cst_35 = arith.constant 1.023000e+03 : f32
    %96 = vector.broadcast %cst_35 : f32 to vector<1x1xf32>
    %97 = arith.divf %95, %96 : vector<1x1xf32>
    %98 = math.sqrt %97 : vector<1x1xf32>
    %99 = vector.extract %98[0, 0] : f32 from vector<1x1xf32>
    %c3_36 = arith.constant 3 : index
    %100 = memref.load %arg3[%c3_36] : memref<4xf32, #tpu.memory_space<smem>>
    memref.store %99, %arg3[%c3_36] : memref<4xf32, #tpu.memory_space<smem>>
    %c0_37 = arith.constant 0 : index
    %c0_38 = arith.constant 0 : index
    %101 = vector.load %arg2[%c0_37, %c0_38] : memref<8x128xf32, #tpu.memory_space<vmem>>, vector<8x128xf32>
    tpu.vector_store %arg2[%c0_37, %c0_38], %80 {strides = array<i32>} : memref<8x128xf32, #tpu.memory_space<vmem>>, vector<8x128xf32>,
    return
  }
}

</mosaic_0001>

<llo_original>
// kernel: mlp_forward.1
$region0: #{mlp_forward.1}
  #allocation0 [shape = 'u32[]', space=smem, size = 0x4, offset = 0x4, fixed_abs, tag = 'smem constant byte address 0x4 - core index']
  #allocation1 [shape = 'u32[144,128]{1,0:T(1,128)}', space=vmem, size = 0x12000, scoped, tag = 'internal scratch']
  %s0 = inlined_call_operand.hbm [shape: f32[8,128], index: 0, kind: input, shape index: {}]
  %s1 = inlined_call_operand.hbm [shape: f32[4,128,128], index: 1, kind: input, shape index: {}]
  %s2 = inlined_call_operand.hbm [shape: f32[8,128], index: 2, kind: output, shape index: {0}]
  %s3 = inlined_call_operand.hbm [shape: f32[4], index: 3, kind: output, shape index: {1}]
  %4 = xla_tuple %s2, %s3
  %s5 = sld [smem:[#allocation0]]
  $region34: #{mlp_forward.1} parent=0
    _
  %s7 = ssub.s32 1, %s5
  %s8 = scalar_select 0, %s7, %s5
  $region1: #{mlp_forward.1} parent=0
    #allocation2 [shape = 'u8[4096]{0}', space=vmem, size = 0x1000, scoped, tag = 'input window, operand 0, single buffered']
    #allocation3 [shape = 's32[1]{0}', space=sflag, size = 0x4, scoped, tag = 'scoped memory for mlp_forward.1']
    #allocation4 [shape = 's32[1]{0}', space=sflag, size = 0x4, scoped, tag = 'scoped memory for mlp_forward.1']
    #allocation5 [shape = 's32[1]{0}', space=sflag, size = 0x4, scoped, tag = 'scoped memory for mlp_forward.1']
    #allocation6 [shape = 'u8[262144]{0}', space=vmem, size = 0x40000, scoped, tag = 'input window, operand 1, single buffered']
    #allocation7 [shape = 's32[1]{0}', space=sflag, size = 0x4, scoped, tag = 'scoped memory for mlp_forward.1']
    #allocation8 [shape = 'u8[4096]{0}', space=vmem, size = 0x1000, scoped, tag = 'output window, operand 0, single buffered']
    #allocation9 [shape = 'u8[512]{0}', space=smem, size = 0x200, scoped, tag = 'output window, operand 1, single buffered']
    %9 = vsyncpa [#allocation3], 0
    %10 = vsyncpa [#allocation7], 0
    %11 = vsyncpa [#allocation4], 0
    %12 = vsyncpa [#allocation5], 0
    // Predicated region
    $region2: #{mlp_forward.1} parent=1 // pred_check
      _
    $region3: #{mlp_forward.1} parent=1 // pred_check_branch
      %14 = sbr.rel (0) target = $region5
    $region4: #{mlp_forward.1} parent=1 // pred_region
      %s16 = ssub.s32 128, 128
      %17 = vsyncadd [#allocation3], %s16
      %s19 = sshll.u32 [#allocation2], 4
      %s20 = int_to_ptr.vmem [resolvable:$true] %s19
      %22 = dma.hbm_to_vmem [thread:$0]  %s0, 128, %s20, [#allocation3]
    $region5: #{mlp_forward.1} parent=1 // pred_fallthru
      _
    // Predicated region
    $region6: #{mlp_forward.1} parent=1 // pred_check
      _
    $region7: #{mlp_forward.1} parent=1 // pred_check_branch
      %24 = sbr.rel (0) target = $region9
    $region8: #{mlp_forward.1} parent=1 // pred_region
      %s26 = ssub.s32 8192, 8192
      %27 = vsyncadd [#allocation7], %s26
      %s28 = sshll.u32 [#allocation6], 4
      %s29 = int_to_ptr.vmem [resolvable:$true] %s28
      %34 = dma.hbm_to_vmem [thread:$0]  %s1, 8192, %s29, [#allocation7], 128, 128, 8
    $region9: #{mlp_forward.1} parent=1 // pred_fallthru
      _
    // Predicated region
    $region10: #{mlp_forward.1} parent=1 // pred_check
      _
    $region11: #{mlp_forward.1} parent=1 // pred_check_branch
      %36 = sbr.rel (0) target = $region13
    $region12: #{mlp_forward.1} parent=1 // pred_region
      %37 = dma.done [#allocation3], 128
    $region13: #{mlp_forward.1} parent=1 // pred_fallthru
      _
    // Predicated region
    $region14: #{mlp_forward.1} parent=1 // pred_check
      _
    $region15: #{mlp_forward.1} parent=1 // pred_check_branch
      %39 = sbr.rel (0) target = $region17
    $region16: #{mlp_forward.1} parent=1 // pred_region
      %40 = dma.done [#allocation7], 8192
    $region17: #{mlp_forward.1} parent=1 // pred_fallthru
      _
    %v41 = vld [vmem:[#allocation2] sm:$0xff]
    %v42 = vld [vmem:[#allocation6] sm:$0xff]
    %v43 = vld [vmem:[#allocation6 + $0x8] sm:$0xff]
    %v44 = vld [vmem:[#allocation6 + $0x10] sm:$0xff]
    %v45 = vld [vmem:[#allocation6 + $0x18] sm:$0xff]
    %v46 = vld [vmem:[#allocation6 + $0x20] sm:$0xff]
    %v47 = vld [vmem:[#allocation6 + $0x28] sm:$0xff]
    %v48 = vld [vmem:[#allocation6 + $0x30] sm:$0xff]
    %v49 = vld [vmem:[#allocation6 + $0x38] sm:$0xff]
    %v50 = vld [vmem:[#allocation6 + $0x40] sm:$0xff]
    %v51 = vld [vmem:[#allocation6 + $0x48] sm:$0xff]
    %v52 = vld [vmem:[#allocation6 + $0x50] sm:$0xff]
    %v53 = vld [vmem:[#allocation6 + $0x58] sm:$0xff]
    %v54 = vld [vmem:[#allocation6 + $0x60] sm:$0xff]
    %v55 = vld [vmem:[#allocation6 + $0x68] sm:$0xff]
    %v56 = vld [vmem:[#allocation6 + $0x70] sm:$0xff]
    %v57 = vld [vmem:[#allocation6 + $0x78] sm:$0xff]
    %58 = vmatprep.subr.mxu0 0.0
    %v59 = vand.u32 %v42, 4294901760
    %60 = vmatpush1.msra.mxu0 %v59
    %61 = vmatprep.subr.mxu0 0.0
    %v62 = vand.u32 %v43, 4294901760
    %63 = vmatpush1.msra.mxu0 %v62
    %64 = vmatprep.subr.mxu0 0.0
    %v65 = vand.u32 %v44, 4294901760
    %66 = vmatpush1.msra.mxu0 %v65
    %67 = vmatprep.subr.mxu0 0.0
    %v68 = vand.u32 %v45, 4294901760
    %69 = vmatpush1.msra.mxu0 %v68
    %70 = vmatprep.subr.mxu0 0.0
    %v71 = vand.u32 %v46, 4294901760
    %72 = vmatpush1.msra.mxu0 %v71
    %73 = vmatprep.subr.mxu0 0.0
    %v74 = vand.u32 %v47, 4294901760
    %75 = vmatpush1.msra.mxu0 %v74
    %76 = vmatprep.subr.mxu0 0.0
    %v77 = vand.u32 %v48, 4294901760
    %78 = vmatpush1.msra.mxu0 %v77
    %79 = vmatprep.subr.mxu0 0.0
    %v80 = vand.u32 %v49, 4294901760
    %81 = vmatpush1.msra.mxu0 %v80
    %82 = vmatprep.subr.mxu0 0.0
    %v83 = vand.u32 %v50, 4294901760
    %84 = vmatpush1.msra.mxu0 %v83
    %85 = vmatprep.subr.mxu0 0.0
    %v86 = vand.u32 %v51, 4294901760
    %87 = vmatpush1.msra.mxu0 %v86
    %88 = vmatprep.subr.mxu0 0.0
    %v89 = vand.u32 %v52, 4294901760
    %90 = vmatpush1.msra.mxu0 %v89
    %91 = vmatprep.subr.mxu0 0.0
    %v92 = vand.u32 %v53, 4294901760
    %93 = vmatpush1.msra.mxu0 %v92
    %94 = vmatprep.subr.mxu0 0.0
    %v95 = vand.u32 %v54, 4294901760
    %96 = vmatpush1.msra.mxu0 %v95
    %97 = vmatprep.subr.mxu0 0.0
    %v98 = vand.u32 %v55, 4294901760
    %99 = vmatpush1.msra.mxu0 %v98
    %100 = vmatprep.subr.mxu0 0.0
    %v101 = vand.u32 %v56, 4294901760
    %102 = vmatpush1.msra.mxu0 %v101
    %103 = vmatprep.subr.mxu0 0.0
    %v104 = vand.u32 %v57, 4294901760
    %105 = vmatpush1.msra.mxu0 %v104
    %106 = vmatprep.subr.mxu0 0.0
    %107 = vmatpush1.msra.mxu0 0.0
    %108 = vmatprep.subr.mxu0 0.0
    %109 = vmatpush1.msra.mxu0 0.0
    %110 = vmatprep.subr.mxu0 0.0
    %111 = vmatpush1.msra.mxu0 0.0
    %112 = vmatprep.subr.mxu0 0.0
    %113 = vmatpush1.msra.mxu0 0.0
    %114 = vmatprep.subr.mxu0 0.0
    %115 = vmatpush1.msra.mxu0 0.0
    %116 = vmatprep.subr.mxu0 0.0
    %117 = vmatpush1.msra.mxu0 0.0
    %118 = vmatprep.subr.mxu0 0.0
    %119 = vmatpush1.msra.mxu0 0.0
    %120 = vmatprep.subr.mxu0 0.0
    %121 = vmatpush1.msra.mxu0 0.0
    %122 = vmatprep.subr.mxu0 0.0
    %123 = vmatpush1.msra.mxu0 0.0
    %124 = vmatprep.subr.mxu0 0.0
    %125 = vmatpush1.msra.mxu0 0.0
    %126 = vmatprep.subr.mxu0 0.0
    %127 = vmatpush1.msra.mxu0 0.0
    %128 = vmatprep.subr.mxu0 0.0
    %129 = vmatpush1.msra.mxu0 0.0
    %130 = vmatprep.subr.mxu0 0.0
    %131 = vmatpush1.msra.mxu0 0.0
    %132 = vmatprep.subr.mxu0 0.0
    %133 = vmatpush1.msra.mxu0 0.0
    %134 = vmatprep.subr.mxu0 0.0
    %135 = vmatpush1.msra.mxu0 0.0
    %136 = vmatprep.subr.mxu0 0.0
    %137 = vmatpush1.msra.mxu0 0.0
    %138 = vmatprep.mubr.f32.mxu0 0.0
    %v139 = vand.u32 %v41, 4294901760
    %v140 = vsub.f32 %v41, %v139
    %v141 = vand.u32 %v140, 4294901760
    %v142 = vsub.f32 %v140, %v141
    %v143 = vand.u32 %v142, 4294901760
    %144 = vmatmul.mubr.f32.gmra.mrb[0].mxu0 %v143
    %v145 = vpop.f32.mrb[0].mxu0
    %v146 = vadd.f32 0.0, %v145
    %v147 = vpop.f32.mrb[0].mxu0
    %148 = vdwg.mxu0
    %149 = vmatprep.subr.mxu0 0.0
    %v150 = vand.u32 %v42, 4294901760
    %v151 = vsub.f32 %v42, %v150
    %v152 = vand.u32 %v151, 4294901760
    %v153 = vsub.f32 %v151, %v152
    %v154 = vand.u32 %v153, 4294901760
    %155 = vmatpush1.msra.mxu0 %v154
    %156 = vmatprep.subr.mxu0 0.0
    %v157 = vand.u32 %v43, 4294901760
    %v158 = vsub.f32 %v43, %v157
    %v159 = vand.u32 %v158, 4294901760
    %v160 = vsub.f32 %v158, %v159
    %v161 = vand.u32 %v160, 4294901760
    %162 = vmatpush1.msra.mxu0 %v161
    %163 = vmatprep.subr.mxu0 0.0
    %v164 = vand.u32 %v44, 4294901760
    %v165 = vsub.f32 %v44, %v164
    %v166 = vand.u32 %v165, 4294901760
    %v167 = vsub.f32 %v165, %v166
    %v168 = vand.u32 %v167, 4294901760
    %169 = vmatpush1.msra.mxu0 %v168
    %170 = vmatprep.subr.mxu0 0.0
    %v171 = vand.u32 %v45, 4294901760
    %v172 = vsub.f32 %v45, %v171
    %v173 = vand.u32 %v172, 4294901760
    %v174 = vsub.f32 %v172, %v173
    %v175 = vand.u32 %v174, 4294901760
    %176 = vmatpush1.msra.mxu0 %v175
    %177 = vmatprep.subr.mxu0 0.0
    %v178 = vand.u32 %v46, 4294901760
    %v179 = vsub.f32 %v46, %v178
    %v180 = vand.u32 %v179, 4294901760
    %v181 = vsub.f32 %v179, %v180
    %v182 = vand.u32 %v181, 4294901760
    %183 = vmatpush1.msra.mxu0 %v182
    %184 = vmatprep.subr.mxu0 0.0
    %v185 = vand.u32 %v47, 4294901760
    %v186 = vsub.f32 %v47, %v185
    %v187 = vand.u32 %v186, 4294901760
    %v188 = vsub.f32 %v186, %v187
    %v189 = vand.u32 %v188, 4294901760
    %190 = vmatpush1.msra.mxu0 %v189
    %191 = vmatprep.subr.mxu0 0.0
    %v192 = vand.u32 %v48, 4294901760
    %v193 = vsub.f32 %v48, %v192
    %v194 = vand.u32 %v193, 4294901760
    %v195 = vsub.f32 %v193, %v194
    %v196 = vand.u32 %v195, 4294901760
    %197 = vmatpush1.msra.mxu0 %v196
    %198 = vmatprep.subr.mxu0 0.0
    %v199 = vand.u32 %v49, 4294901760
    %v200 = vsub.f32 %v49, %v199
    %v201 = vand.u32 %v200, 4294901760
    %v202 = vsub.f32 %v200, %v201
    %v203 = vand.u32 %v202, 4294901760
    %204 = vmatpush1.msra.mxu0 %v203
    %205 = vmatprep.subr.mxu0 0.0
    %v206 = vand.u32 %v50, 4294901760
    %v207 = vsub.f32 %v50, %v206
    %v208 = vand.u32 %v207, 4294901760
    %v209 = vsub.f32 %v207, %v208
    %v210 = vand.u32 %v209, 4294901760
    %211 = vmatpush1.msra.mxu0 %v210
    %212 = vmatprep.subr.mxu0 0.0
    %v213 = vand.u32 %v51, 4294901760
    %v214 = vsub.f32 %v51, %v213
    %v215 = vand.u32 %v214, 4294901760
    %v216 = vsub.f32 %v214, %v215
    %v217 = vand.u32 %v216, 4294901760
    %218 = vmatpush1.msra.mxu0 %v217
    %219 = vmatprep.subr.mxu0 0.0
    %v220 = vand.u32 %v52, 4294901760
    %v221 = vsub.f32 %v52, %v220
    %v222 = vand.u32 %v221, 4294901760
    %v223 = vsub.f32 %v221, %v222
    %v224 = vand.u32 %v223, 4294901760
    %225 = vmatpush1.msra.mxu0 %v224
    %226 = vmatprep.subr.mxu0 0.0
    %v227 = vand.u32 %v53, 4294901760
    %v228 = vsub.f32 %v53, %v227
    %v229 = vand.u32 %v228, 4294901760
    %v230 = vsub.f32 %v228, %v229
    %v231 = vand.u32 %v230, 4294901760
    %232 = vmatpush1.msra.mxu0 %v231
    %233 = vmatprep.subr.mxu0 0.0
    %v234 = vand.u32 %v54, 4294901760
    %v235 = vsub.f32 %v54, %v234
    %v236 = vand.u32 %v235, 4294901760
    %v237 = vsub.f32 %v235, %v236
    %v238 = vand.u32 %v237, 4294901760
    %239 = vmatpush1.msra.mxu0 %v238
    %240 = vmatprep.subr.mxu0 0.0
    %v241 = vand.u32 %v55, 4294901760
    %v242 = vsub.f32 %v55, %v241
    %v243 = vand.u32 %v242, 4294901760
    %v244 = vsub.f32 %v242, %v243
    %v245 = vand.u32 %v244, 4294901760
    %246 = vmatpush1.msra.mxu0 %v245
    %247 = vmatprep.subr.mxu0 0.0
    %v248 = vand.u32 %v56, 4294901760
    %v249 = vsub.f32 %v56, %v248
    %v250 = vand.u32 %v249, 4294901760
    %v251 = vsub.f32 %v249, %v250
    %v252 = vand.u32 %v251, 4294901760
    %253 = vmatpush1.msra.mxu0 %v252
    %254 = vmatprep.subr.mxu0 0.0
    %v255 = vand.u32 %v57, 4294901760
    %v256 = vsub.f32 %v57, %v255
    %v257 = vand.u32 %v256, 4294901760
    %v258 = vsub.f32 %v256, %v257
    %v259 = vand.u32 %v258, 4294901760
    %260 = vmatpush1.msra.mxu0 %v259
    %261 = vmatprep.subr.mxu0 0.0
    %262 = vmatpush1.msra.mxu0 0.0
    %263 = vmatprep.subr.mxu0 0.0
    %264 = vmatpush1.msra.mxu0 0.0
    %265 = vmatprep.subr.mxu0 0.0
    %266 = vmatpush1.msra.mxu0 0.0
    %267 = vmatprep.subr.mxu0 0.0
    %268 = vmatpush1.msra.mxu0 0.0
    %269 = vmatprep.subr.mxu0 0.0
    %270 = vmatpush1.msra.mxu0 0.0
    %271 = vmatprep.subr.mxu0 0.0
    %272 = vmatpush1.msra.mxu0 0.0
    %273 = vmatprep.subr.mxu0 0.0
    %274 = vmatpush1.msra.mxu0 0.0
    %275 = vmatprep.subr.mxu0 0.0
    %276 = vmatpush1.msra.mxu0 0.0
    %277 = vmatprep.subr.mxu0 0.0
    %278 = vmatpush1.msra.mxu0 0.0
    %279 = vmatprep.subr.mxu0 0.0
    %280 = vmatpush1.msra.mxu0 0.0
    %281 = vmatprep.subr.mxu0 0.0
    %282 = vmatpush1.msra.mxu0 0.0
    %283 = vmatprep.subr.mxu0 0.0
    %284 = vmatpush1.msra.mxu0 0.0
    %285 = vmatprep.subr.mxu0 0.0
    %286 = vmatpush1.msra.mxu0 0.0
    %287 = vmatprep.subr.mxu0 0.0
    %288 = vmatpush1.msra.mxu0 0.0
    %289 = vmatprep.subr.mxu0 0.0
    %290 = vmatpush1.msra.mxu0 0.0
    %291 = vmatprep.subr.mxu0 0.0
    %292 = vmatpush1.msra.mxu0 0.0
    %293 = vmatprep.mubr.f32.mxu0 0.0
    %v294 = vand.u32 %v41, 4294901760
    %295 = vmatmul.mubr.f32.gmra.mrb[0].mxu0 %v294
    %v296 = vpop.f32.mrb[0].mxu0
    %v297 = vadd.f32 %v146, %v296
    %v298 = vpop.f32.mrb[0].mxu0
    %299 = vdwg.mxu0
    %300 = vmatprep.subr.mxu0 0.0
    %v301 = vand.u32 %v42, 4294901760
    %v302 = vsub.f32 %v42, %v301
    %303 = vmatpush1.msra.mxu0 %v302
    %304 = vmatprep.subr.mxu0 0.0
    %v305 = vand.u32 %v43, 4294901760
    %v306 = vsub.f32 %v43, %v305
    %307 = vmatpush1.msra.mxu0 %v306
    %308 = vmatprep.subr.mxu0 0.0
    %v309 = vand.u32 %v44, 4294901760
    %v310 = vsub.f32 %v44, %v309
    %311 = vmatpush1.msra.mxu0 %v310
    %312 = vmatprep.subr.mxu0 0.0
    %v313 = vand.u32 %v45, 4294901760
    %v314 = vsub.f32 %v45, %v313
    %315 = vmatpush1.msra.mxu0 %v314
    %316 = vmatprep.subr.mxu0 0.0
    %v317 = vand.u32 %v46, 4294901760
    %v318 = vsub.f32 %v46, %v317
    %319 = vmatpush1.msra.mxu0 %v318
    %320 = vmatprep.subr.mxu0 0.0
    %v321 = vand.u32 %v47, 4294901760
    %v322 = vsub.f32 %v47, %v321
    %323 = vmatpush1.msra.mxu0 %v322
    %324 = vmatprep.subr.mxu0 0.0
    %v325 = vand.u32 %v48, 4294901760
    %v326 = vsub.f32 %v48, %v325
    %327 = vmatpush1.msra.mxu0 %v326
    %328 = vmatprep.subr.mxu0 0.0
    %v329 = vand.u32 %v49, 4294901760
    %v330 = vsub.f32 %v49, %v329
    %331 = vmatpush1.msra.mxu0 %v330
    %332 = vmatprep.subr.mxu0 0.0
    %v333 = vand.u32 %v50, 4294901760
    %v334 = vsub.f32 %v50, %v333
    %335 = vmatpush1.msra.mxu0 %v334
    %336 = vmatprep.subr.mxu0 0.0
    %v337 = vand.u32 %v51, 4294901760
    %v338 = vsub.f32 %v51, %v337
    %339 = vmatpush1.msra.mxu0 %v338
    %340 = vmatprep.subr.mxu0 0.0
    %v341 = vand.u32 %v52, 4294901760
    %v342 = vsub.f32 %v52, %v341
    %343 = vmatpush1.msra.mxu0 %v342
    %344 = vmatprep.subr.mxu0 0.0
    %v345 = vand.u32 %v53, 4294901760
    %v346 = vsub.f32 %v53, %v345
    %347 = vmatpush1.msra.mxu0 %v346
    %348 = vmatprep.subr.mxu0 0.0
    %v349 = vand.u32 %v54, 4294901760
    %v350 = vsub.f32 %v54, %v349
    %351 = vmatpush1.msra.mxu0 %v350
    %352 = vmatprep.subr.mxu0 0.0
    %v353 = vand.u32 %v55, 4294901760
    %v354 = vsub.f32 %v55, %v353
    %355 = vmatpush1.msra.mxu0 %v354
    %356 = vmatprep.subr.mxu0 0.0
    %v357 = vand.u32 %v56, 4294901760
    %v358 = vsub.f32 %v56, %v357
    %359 = vmatpush1.msra.mxu0 %v358
    %360 = vmatprep.subr.mxu0 0.0
    %v361 = vand.u32 %v57, 4294901760
    %v362 = vsub.f32 %v57, %v361
    %363 = vmatpush1.msra.mxu0 %v362
    %364 = vmatprep.subr.mxu0 0.0
    %365 = vmatpush1.msra.mxu0 0.0
    %366 = vmatprep.subr.mxu0 0.0
    %367 = vmatpush1.msra.mxu0 0.0
    %368 = vmatprep.subr.mxu0 0.0
    %369 = vmatpush1.msra.mxu0 0.0
    %370 = vmatprep.subr.mxu0 0.0
    %371 = vmatpush1.msra.mxu0 0.0
    %372 = vmatprep.subr.mxu0 0.0
    %373 = vmatpush1.msra.mxu0 0.0
    %374 = vmatprep.subr.mxu0 0.0
    %375 = vmatpush1.msra.mxu0 0.0
    %376 = vmatprep.subr.mxu0 0.0
    %377 = vmatpush1.msra.mxu0 0.0
    %378 = vmatprep.subr.mxu0 0.0
    %379 = vmatpush1.msra.mxu0 0.0
    %380 = vmatprep.subr.mxu0 0.0
    %381 = vmatpush1.msra.mxu0 0.0
    %382 = vmatprep.subr.mxu0 0.0
    %383 = vmatpush1.msra.mxu0 0.0
    %384 = vmatprep.subr.mxu0 0.0
    %385 = vmatpush1.msra.mxu0 0.0
    %386 = vmatprep.subr.mxu0 0.0
    %387 = vmatpush1.msra.mxu0 0.0
    %388 = vmatprep.subr.mxu0 0.0
    %389 = vmatpush1.msra.mxu0 0.0
    %390 = vmatprep.subr.mxu0 0.0
    %391 = vmatpush1.msra.mxu0 0.0
    %392 = vmatprep.subr.mxu0 0.0
    %393 = vmatpush1.msra.mxu0 0.0
    %394 = vmatprep.subr.mxu0 0.0
    %395 = vmatpush1.msra.mxu0 0.0
    %396 = vmatprep.mubr.f32.mxu0 0.0
    %v397 = vand.u32 %v41, 4294901760
    %v398 = vsub.f32 %v41, %v397
    %399 = vmatmul.mubr.f32.gmra.mrb[0].mxu0 %v398
    %v400 = vpop.f32.mrb[0].mxu0
    %v401 = vadd.f32 %v297, %v400
    %v402 = vpop.f32.mrb[0].mxu0
    %403 = vdwg.mxu0
    %404 = vmatprep.subr.mxu0 0.0
    %v405 = vand.u32 %v42, 4294901760
    %406 = vmatpush1.msra.mxu0 %v405
    %407 = vmatprep.subr.mxu0 0.0
    %v408 = vand.u32 %v43, 4294901760
    %409 = vmatpush1.msra.mxu0 %v408
    %410 = vmatprep.subr.mxu0 0.0
    %v411 = vand.u32 %v44, 4294901760
    %412 = vmatpush1.msra.mxu0 %v411
    %413 = vmatprep.subr.mxu0 0.0
    %v414 = vand.u32 %v45, 4294901760
    %415 = vmatpush1.msra.mxu0 %v414
    %416 = vmatprep.subr.mxu0 0.0
    %v417 = vand.u32 %v46, 4294901760
    %418 = vmatpush1.msra.mxu0 %v417
    %419 = vmatprep.subr.mxu0 0.0
    %v420 = vand.u32 %v47, 4294901760
    %421 = vmatpush1.msra.mxu0 %v420
    %422 = vmatprep.subr.mxu0 0.0
    %v423 = vand.u32 %v48, 4294901760
    %424 = vmatpush1.msra.mxu0 %v423
    %425 = vmatprep.subr.mxu0 0.0
    %v426 = vand.u32 %v49, 4294901760
    %427 = vmatpush1.msra.mxu0 %v426
    %428 = vmatprep.subr.mxu0 0.0
    %v429 = vand.u32 %v50, 4294901760
    %430 = vmatpush1.msra.mxu0 %v429
    %431 = vmatprep.subr.mxu0 0.0
    %v432 = vand.u32 %v51, 4294901760
    %433 = vmatpush1.msra.mxu0 %v432
    %434 = vmatprep.subr.mxu0 0.0
    %v435 = vand.u32 %v52, 4294901760
    %436 = vmatpush1.msra.mxu0 %v435
    %437 = vmatprep.subr.mxu0 0.0
    %v438 = vand.u32 %v53, 4294901760
    %439 = vmatpush1.msra.mxu0 %v438
    %440 = vmatprep.subr.mxu0 0.0
    %v441 = vand.u32 %v54, 4294901760
    %442 = vmatpush1.msra.mxu0 %v441
    %443 = vmatprep.subr.mxu0 0.0
    %v444 = vand.u32 %v55, 4294901760
    %445 = vmatpush1.msra.mxu0 %v444
    %446 = vmatprep.subr.mxu0 0.0
    %v447 = vand.u32 %v56, 4294901760
    %448 = vmatpush1.msra.mxu0 %v447
    %449 = vmatprep.subr.mxu0 0.0
    %v450 = vand.u32 %v57, 4294901760
    %451 = vmatpush1.msra.mxu0 %v450
    %452 = vmatprep.subr.mxu0 0.0
    %453 = vmatpush1.msra.mxu0 0.0
    %454 = vmatprep.subr.mxu0 0.0
    %455 = vmatpush1.msra.mxu0 0.0
    %456 = vmatprep.subr.mxu0 0.0
    %457 = vmatpush1.msra.mxu0 0.0
    %458 = vmatprep.subr.mxu0 0.0
    %459 = vmatpush1.msra.mxu0 0.0
    %460 = vmatprep.subr.mxu0 0.0
    %461 = vmatpush1.msra.mxu0 0.0
    %462 = vmatprep.subr.mxu0 0.0
    %463 = vmatpush1.msra.mxu0 0.0
    %464 = vmatprep.subr.mxu0 0.0
    %465 = vmatpush1.msra.mxu0 0.0
    %466 = vmatprep.subr.mxu0 0.0
    %467 = vmatpush1.msra.mxu0 0.0
    %468 = vmatprep.subr.mxu0 0.0
    %469 = vmatpush1.msra.mxu0 0.0
    %470 = vmatprep.subr.mxu0 0.0
    %471 = vmatpush1.msra.mxu0 0.0
    %472 = vmatprep.subr.mxu0 0.0
    %473 = vmatpush1.msra.mxu0 0.0
    %474 = vmatprep.subr.mxu0 0.0
    %475 = vmatpush1.msra.mxu0 0.0
    %476 = vmatprep.subr.mxu0 0.0
    %477 = vmatpush1.msra.mxu0 0.0
    %478 = vmatprep.subr.mxu0 0.0
    %479 = vmatpush1.msra.mxu0 0.0
    %480 = vmatprep.subr.mxu0 0.0
    %481 = vmatpush1.msra.mxu0 0.0
    %482 = vmatprep.subr.mxu0 0.0
    %483 = vmatpush1.msra.mxu0 0.0
    %484 = vmatprep.mubr.f32.mxu0 0.0
    %v485 = vand.u32 %v41, 4294901760
    %v486 = vsub.f32 %v41, %v485
    %v487 = vand.u32 %v486, 4294901760
    %488 = vmatmul.mubr.f32.gmra.mrb[0].mxu0 %v487
    %v489 = vpop.f32.mrb[0].mxu0
    %v490 = vadd.f32 %v401, %v489
    %v491 = vpop.f32.mrb[0].mxu0
    %492 = vdwg.mxu0
    %493 = vmatprep.subr.mxu0 0.0
    %v494 = vand.u32 %v42, 4294901760
    %v495 = vsub.f32 %v42, %v494
    %v496 = vand.u32 %v495, 4294901760
    %497 = vmatpush1.msra.mxu0 %v496
    %498 = vmatprep.subr.mxu0 0.0
    %v499 = vand.u32 %v43, 4294901760
    %v500 = vsub.f32 %v43, %v499
    %v501 = vand.u32 %v500, 4294901760
    %502 = vmatpush1.msra.mxu0 %v501
    %503 = vmatprep.subr.mxu0 0.0
    %v504 = vand.u32 %v44, 4294901760
    %v505 = vsub.f32 %v44, %v504
    %v506 = vand.u32 %v505, 4294901760
    %507 = vmatpush1.msra.mxu0 %v506
    %508 = vmatprep.subr.mxu0 0.0
    %v509 = vand.u32 %v45, 4294901760
    %v510 = vsub.f32 %v45, %v509
    %v511 = vand.u32 %v510, 4294901760
    %512 = vmatpush1.msra.mxu0 %v511
    %513 = vmatprep.subr.mxu0 0.0
    %v514 = vand.u32 %v46, 4294901760
    %v515 = vsub.f32 %v46, %v514
    %v516 = vand.u32 %v515, 4294901760
    %517 = vmatpush1.msra.mxu0 %v516
    %518 = vmatprep.subr.mxu0 0.0
    %v519 = vand.u32 %v47, 4294901760
    %v520 = vsub.f32 %v47, %v519
    %v521 = vand.u32 %v520, 4294901760
    %522 = vmatpush1.msra.mxu0 %v521
    %523 = vmatprep.subr.mxu0 0.0
    %v524 = vand.u32 %v48, 4294901760
    %v525 = vsub.f32 %v48, %v524
    %v526 = vand.u32 %v525, 4294901760
    %527 = vmatpush1.msra.mxu0 %v526
    %528 = vmatprep.subr.mxu0 0.0
    %v529 = vand.u32 %v49, 4294901760
    %v530 = vsub.f32 %v49, %v529
    %v531 = vand.u32 %v530, 4294901760
    %532 = vmatpush1.msra.mxu0 %v531
    %533 = vmatprep.subr.mxu0 0.0
    %v534 = vand.u32 %v50, 4294901760
    %v535 = vsub.f32 %v50, %v534
    %v536 = vand.u32 %v535, 4294901760
    %537 = vmatpush1.msra.mxu0 %v536
    %538 = vmatprep.subr.mxu0 0.0
    %v539 = vand.u32 %v51, 4294901760
    %v540 = vsub.f32 %v51, %v539
    %v541 = vand.u32 %v540, 4294901760
    %542 = vmatpush1.msra.mxu0 %v541
    %543 = vmatprep.subr.mxu0 0.0
    %v544 = vand.u32 %v52, 4294901760
    %v545 = vsub.f32 %v52, %v544
    %v546 = vand.u32 %v545, 4294901760
    %547 = vmatpush1.msra.mxu0 %v546
    %548 = vmatprep.subr.mxu0 0.0
    %v549 = vand.u32 %v53, 4294901760
    %v550 = vsub.f32 %v53, %v549
    %v551 = vand.u32 %v550, 4294901760
    %552 = vmatpush1.msra.mxu0 %v551
    %553 = vmatprep.subr.mxu0 0.0
    %v554 = vand.u32 %v54, 4294901760
    %v555 = vsub.f32 %v54, %v554
    %v556 = vand.u32 %v555, 4294901760
    %557 = vmatpush1.msra.mxu0 %v556
    %558 = vmatprep.subr.mxu0 0.0
    %v559 = vand.u32 %v55, 4294901760
    %v560 = vsub.f32 %v55, %v559
    %v561 = vand.u32 %v560, 4294901760
    %562 = vmatpush1.msra.mxu0 %v561
    %563 = vmatprep.subr.mxu0 0.0
    %v564 = vand.u32 %v56, 4294901760
    %v565 = vsub.f32 %v56, %v564
    %v566 = vand.u32 %v565, 4294901760
    %567 = vmatpush1.msra.mxu0 %v566
    %568 = vmatprep.subr.mxu0 0.0
    %v569 = vand.u32 %v57, 4294901760
    %v570 = vsub.f32 %v57, %v569
    %v571 = vand.u32 %v570, 4294901760
    %572 = vmatpush1.msra.mxu0 %v571
    %573 = vmatprep.subr.mxu0 0.0
    %574 = vmatpush1.msra.mxu0 0.0
    %575 = vmatprep.subr.mxu0 0.0
    %576 = vmatpush1.msra.mxu0 0.0
    %577 = vmatprep.subr.mxu0 0.0
    %578 = vmatpush1.msra.mxu0 0.0
    %579 = vmatprep.subr.mxu0 0.0
    %580 = vmatpush1.msra.mxu0 0.0
    %581 = vmatprep.subr.mxu0 0.0
    %582 = vmatpush1.msra.mxu0 0.0
    %583 = vmatprep.subr.mxu0 0.0
    %584 = vmatpush1.msra.mxu0 0.0
    %585 = vmatprep.subr.mxu0 0.0
    %586 = vmatpush1.msra.mxu0 0.0
    %587 = vmatprep.subr.mxu0 0.0
    %588 = vmatpush1.msra.mxu0 0.0
    %589 = vmatprep.subr.mxu0 0.0
    %590 = vmatpush1.msra.mxu0 0.0
    %591 = vmatprep.subr.mxu0 0.0
    %592 = vmatpush1.msra.mxu0 0.0
    %593 = vmatprep.subr.mxu0 0.0
    %594 = vmatpush1.msra.mxu0 0.0
    %595 = vmatprep.subr.mxu0 0.0
    %596 = vmatpush1.msra.mxu0 0.0
    %597 = vmatprep.subr.mxu0 0.0
    %598 = vmatpush1.msra.mxu0 0.0
    %599 = vmatprep.subr.mxu0 0.0
    %600 = vmatpush1.msra.mxu0 0.0
    %601 = vmatprep.subr.mxu0 0.0
    %602 = vmatpush1.msra.mxu0 0.0
    %603 = vmatprep.subr.mxu0 0.0
    %604 = vmatpush1.msra.mxu0 0.0
    %605 = vmatprep.mubr.f32.mxu0 0.0
    %v606 = vand.u32 %v41, 4294901760
    %607 = vmatmul.mubr.f32.gmra.mrb[0].mxu0 %v606
    %v608 = vpop.f32.mrb[0].mxu0
    %v609 = vadd.f32 %v490, %v608
    %v610 = vpop.f32.mrb[0].mxu0
    %611 = vdwg.mxu0
    %612 = vmatprep.subr.mxu0 0.0
    %v613 = vand.u32 %v42, 4294901760
    %614 = vmatpush1.msra.mxu0 %v613
    %615 = vmatprep.subr.mxu0 0.0
    %v616 = vand.u32 %v43, 4294901760
    %617 = vmatpush1.msra.mxu0 %v616
    %618 = vmatprep.subr.mxu0 0.0
    %v619 = vand.u32 %v44, 4294901760
    %620 = vmatpush1.msra.mxu0 %v619
    %621 = vmatprep.subr.mxu0 0.0
    %v622 = vand.u32 %v45, 4294901760
    %623 = vmatpush1.msra.mxu0 %v622
    %624 = vmatprep.subr.mxu0 0.0
    %v625 = vand.u32 %v46, 4294901760
    %626 = vmatpush1.msra.mxu0 %v625
    %627 = vmatprep.subr.mxu0 0.0
    %v628 = vand.u32 %v47, 4294901760
    %629 = vmatpush1.msra.mxu0 %v628
    %630 = vmatprep.subr.mxu0 0.0
    %v631 = vand.u32 %v48, 4294901760
    %632 = vmatpush1.msra.mxu0 %v631
    %633 = vmatprep.subr.mxu0 0.0
    %v634 = vand.u32 %v49, 4294901760
    %635 = vmatpush1.msra.mxu0 %v634
    %636 = vmatprep.subr.mxu0 0.0
    %v637 = vand.u32 %v50, 4294901760
    %638 = vmatpush1.msra.mxu0 %v637
    %639 = vmatprep.subr.mxu0 0.0
    %v640 = vand.u32 %v51, 4294901760
    %641 = vmatpush1.msra.mxu0 %v640
    %642 = vmatprep.subr.mxu0 0.0
    %v643 = vand.u32 %v52, 4294901760
    %644 = vmatpush1.msra.mxu0 %v643
    %645 = vmatprep.subr.mxu0 0.0
    %v646 = vand.u32 %v53, 4294901760
    %647 = vmatpush1.msra.mxu0 %v646
    %648 = vmatprep.subr.mxu0 0.0
    %v649 = vand.u32 %v54, 4294901760
    %650 = vmatpush1.msra.mxu0 %v649
    %651 = vmatprep.subr.mxu0 0.0
    %v652 = vand.u32 %v55, 4294901760
    %653 = vmatpush1.msra.mxu0 %v652
    %654 = vmatprep.subr.mxu0 0.0
    %v655 = vand.u32 %v56, 4294901760
    %656 = vmatpush1.msra.mxu0 %v655
    %657 = vmatprep.subr.mxu0 0.0
    %v658 = vand.u32 %v57, 4294901760
    %659 = vmatpush1.msra.mxu0 %v658
    %660 = vmatprep.subr.mxu0 0.0
    %661 = vmatpush1.msra.mxu0 0.0
    %662 = vmatprep.subr.mxu0 0.0
    %663 = vmatpush1.msra.mxu0 0.0
    %664 = vmatprep.subr.mxu0 0.0
    %665 = vmatpush1.msra.mxu0 0.0
    %666 = vmatprep.subr.mxu0 0.0
    %667 = vmatpush1.msra.mxu0 0.0
    %668 = vmatprep.subr.mxu0 0.0
    %669 = vmatpush1.msra.mxu0 0.0
    %670 = vmatprep.subr.mxu0 0.0
    %671 = vmatpush1.msra.mxu0 0.0
    %672 = vmatprep.subr.mxu0 0.0
    %673 = vmatpush1.msra.mxu0 0.0
    %674 = vmatprep.subr.mxu0 0.0
    %675 = vmatpush1.msra.mxu0 0.0
    %676 = vmatprep.subr.mxu0 0.0
    %677 = vmatpush1.msra.mxu0 0.0
    %678 = vmatprep.subr.mxu0 0.0
    %679 = vmatpush1.msra.mxu0 0.0
    %680 = vmatprep.subr.mxu0 0.0
    %681 = vmatpush1.msra.mxu0 0.0
    %682 = vmatprep.subr.mxu0 0.0
    %683 = vmatpush1.msra.mxu0 0.0
    %684 = vmatprep.subr.mxu0 0.0
    %685 = vmatpush1.msra.mxu0 0.0
    %686 = vmatprep.subr.mxu0 0.0
    %687 = vmatpush1.msra.mxu0 0.0
    %688 = vmatprep.subr.mxu0 0.0
    %689 = vmatpush1.msra.mxu0 0.0
    %690 = vmatprep.subr.mxu0 0.0
    %691 = vmatpush1.msra.mxu0 0.0
    %692 = vmatprep.mubr.f32.mxu0 0.0
    %v693 = vand.u32 %v41, 4294901760
    %694 = vmatmul.mubr.f32.gmra.mrb[0].mxu0 %v693
    %v695 = vpop.f32.mrb[0].mxu0
    %v696 = vadd.f32 %v609, %v695
    %v697 = vpop.f32.mrb[0].mxu0
    %698 = vdwg.mxu0
    %v699 = vmax.f32 %v696, 0.0
    %700 = vadd.xlane.f32.xlu0 %v699
    %v701 = vpop.xlane.xlu0 %700
    %v702 = vrot.slane %v701, 4
    %v703 = vadd.f32 %v701, %v702
    %v704 = vrot.slane %v703, 2
    %v705 = vadd.f32 %v703, %v704
    %v706 = vrot.slane %v705, 1
    %v707 = vadd.f32 %v705, %v706
    %s708 = vtos %v707
    %v709 = vstv %s708
    %v710 = vrcp.pop 1024.0
    %v711 = vmul.f32 %v709, %v710
    %v712 = vsub.f32 %v699, %v711
    %v713 = vmul.f32 %v712, %v712
    %714 = vadd.xlane.f32.xlu0 %v713
    %v715 = vpop.xlane.xlu0 %714
    %v716 = vrot.slane %v715, 4
    %v717 = vadd.f32 %v715, %v716
    %v718 = vrot.slane %v717, 2
    %v719 = vadd.f32 %v717, %v718
    %v720 = vrot.slane %v719, 1
    %v721 = vadd.f32 %v719, %v720
    %s722 = vtos %v721
    %v723 = vstv %s722
    %v724 = vrcp.pop 1023.0
    %v725 = vmul.f32 %v723, %v724
    %v726 = vrsqrt.pop %v725
    %v727 = vmul.f32 %v725, %v726
    %vm728 = vcmp.eq.f32.partialorder %v725, inf
    %v729 = vsel %vm728, %v725, %v727
    %vm730 = vcmp.eq.f32.partialorder %v725, 0.0
    %v731 = vand.u32 %v725, 2147483648
    %v732 = vsel %vm730, %v731, %v729
    %s733 = vtos %v732
    %s734 = scalar_lea.smem [#allocation9], 0
    %735 = sst [smem:[%s734]] %s733
    %s736 = scalar_lea.vmem [#allocation6], 128
    %v737 = vld [vmem:[%s736] sm:$0xff]
    %v738 = vld [vmem:[%s736 + $0x8] sm:$0xff]
    %v739 = vld [vmem:[%s736 + $0x10] sm:$0xff]
    %v740 = vld [vmem:[%s736 + $0x18] sm:$0xff]
    %v741 = vld [vmem:[%s736 + $0x20] sm:$0xff]
    %v742 = vld [vmem:[%s736 + $0x28] sm:$0xff]
    %v743 = vld [vmem:[%s736 + $0x30] sm:$0xff]
    %v744 = vld [vmem:[%s736 + $0x38] sm:$0xff]
    %v745 = vld [vmem:[%s736 + $0x40] sm:$0xff]
    %v746 = vld [vmem:[%s736 + $0x48] sm:$0xff]
    %v747 = vld [vmem:[%s736 + $0x50] sm:$0xff]
    %v748 = vld [vmem:[%s736 + $0x58] sm:$0xff]
    %v749 = vld [vmem:[%s736 + $0x60] sm:$0xff]
    %v750 = vld [vmem:[%s736 + $0x68] sm:$0xff]
    %v751 = vld [vmem:[%s736 + $0x70] sm:$0xff]
    %v752 = vld [vmem:[%s736 + $0x78] sm:$0xff]
    %753 = vmatprep.subr.mxu0 0.0
    %v754 = vand.u32 %v737, 4294901760
    %755 = vmatpush1.msra.mxu0 %v754
    %756 = vmatprep.subr.mxu0 0.0
    %v757 = vand.u32 %v738, 4294901760
    %758 = vmatpush1.msra.mxu0 %v757
    %759 = vmatprep.subr.mxu0 0.0
    %v760 = vand.u32 %v739, 4294901760
    %761 = vmatpush1.msra.mxu0 %v760
    %762 = vmatprep.subr.mxu0 0.0
    %v763 = vand.u32 %v740, 4294901760
    %764 = vmatpush1.msra.mxu0 %v763
    %765 = vmatprep.subr.mxu0 0.0
    %v766 = vand.u32 %v741, 4294901760
    %767 = vmatpush1.msra.mxu0 %v766
    %768 = vmatprep.subr.mxu0 0.0
    %v769 = vand.u32 %v742, 4294901760
    %770 = vmatpush1.msra.mxu0 %v769
    %771 = vmatprep.subr.mxu0 0.0
    %v772 = vand.u32 %v743, 4294901760
    %773 = vmatpush1.msra.mxu0 %v772
    %774 = vmatprep.subr.mxu0 0.0
    %v775 = vand.u32 %v744, 4294901760
    %776 = vmatpush1.msra.mxu0 %v775
    %777 = vmatprep.subr.mxu0 0.0
    %v778 = vand.u32 %v745, 4294901760
    %779 = vmatpush1.msra.mxu0 %v778
    %780 = vmatprep.subr.mxu0 0.0
    %v781 = vand.u32 %v746, 4294901760
    %782 = vmatpush1.msra.mxu0 %v781
    %783 = vmatprep.subr.mxu0 0.0
    %v784 = vand.u32 %v747, 4294901760
    %785 = vmatpush1.msra.mxu0 %v784
    %786 = vmatprep.subr.mxu0 0.0
    %v787 = vand.u32 %v748, 4294901760
    %788 = vmatpush1.msra.mxu0 %v787
    %789 = vmatprep.subr.mxu0 0.0
    %v790 = vand.u32 %v749, 4294901760
    %791 = vmatpush1.msra.mxu0 %v790
    %792 = vmatprep.subr.mxu0 0.0
    %v793 = vand.u32 %v750, 4294901760
    %794 = vmatpush1.msra.mxu0 %v793
    %795 = vmatprep.subr.mxu0 0.0
    %v796 = vand.u32 %v751, 4294901760
    %797 = vmatpush1.msra.mxu0 %v796
    %798 = vmatprep.subr.mxu0 0.0
    %v799 = vand.u32 %v752, 4294901760
    %800 = vmatpush1.msra.mxu0 %v799
    %801 = vmatprep.subr.mxu0 0.0
    %802 = vmatpush1.msra.mxu0 0.0
    %803 = vmatprep.subr.mxu0 0.0
    %804 = vmatpush1.msra.mxu0 0.0
    %805 = vmatprep.subr.mxu0 0.0
    %806 = vmatpush1.msra.mxu0 0.0
    %807 = vmatprep.subr.mxu0 0.0
    %808 = vmatpush1.msra.mxu0 0.0
    %809 = vmatprep.subr.mxu0 0.0
    %810 = vmatpush1.msra.mxu0 0.0
    %811 = vmatprep.subr.mxu0 0.0
    %812 = vmatpush1.msra.mxu0 0.0
    %813 = vmatprep.subr.mxu0 0.0
    %814 = vmatpush1.msra.mxu0 0.0
    %815 = vmatprep.subr.mxu0 0.0
    %816 = vmatpush1.msra.mxu0 0.0
    %817 = vmatprep.subr.mxu0 0.0
    %818 = vmatpush1.msra.mxu0 0.0
    %819 = vmatprep.subr.mxu0 0.0
    %820 = vmatpush1.msra.mxu0 0.0
    %821 = vmatprep.subr.mxu0 0.0
    %822 = vmatpush1.msra.mxu0 0.0
    %823 = vmatprep.subr.mxu0 0.0
    %824 = vmatpush1.msra.mxu0 0.0
    %825 = vmatprep.subr.mxu0 0.0
    %826 = vmatpush1.msra.mxu0 0.0
    %827 = vmatprep.subr.mxu0 0.0
    %828 = vmatpush1.msra.mxu0 0.0
    %829 = vmatprep.subr.mxu0 0.0
    %830 = vmatpush1.msra.mxu0 0.0
    %831 = vmatprep.subr.mxu0 0.0
    %832 = vmatpush1.msra.mxu0 0.0
    %833 = vmatprep.mubr.f32.mxu0 0.0
    %v834 = vand.u32 %v699, 4294901760
    %v835 = vsub.f32 %v699, %v834
    %v836 = vand.u32 %v835, 4294901760
    %v837 = vsub.f32 %v835, %v836
    %v838 = vand.u32 %v837, 4294901760
    %839 = vmatmul.mubr.f32.gmra.mrb[0].mxu0 %v838
    %v840 = vpop.f32.mrb[0].mxu0
    %v841 = vadd.f32 0.0, %v840
    %v842 = vpop.f32.mrb[0].mxu0
    %843 = vdwg.mxu0
    %844 = vmatprep.subr.mxu0 0.0
    %v845 = vand.u32 %v737, 4294901760
    %v846 = vsub.f32 %v737, %v845
    %v847 = vand.u32 %v846, 4294901760
    %v848 = vsub.f32 %v846, %v847
    %v849 = vand.u32 %v848, 4294901760
    %850 = vmatpush1.msra.mxu0 %v849
    %851 = vmatprep.subr.mxu0 0.0
    %v852 = vand.u32 %v738, 4294901760
    %v853 = vsub.f32 %v738, %v852
    %v854 = vand.u32 %v853, 4294901760
    %v855 = vsub.f32 %v853, %v854
    %v856 = vand.u32 %v855, 4294901760
    %857 = vmatpush1.msra.mxu0 %v856
    %858 = vmatprep.subr.mxu0 0.0
    %v859 = vand.u32 %v739, 4294901760
    %v860 = vsub.f32 %v739, %v859
    %v861 = vand.u32 %v860, 4294901760
    %v862 = vsub.f32 %v860, %v861
    %v863 = vand.u32 %v862, 4294901760
    %864 = vmatpush1.msra.mxu0 %v863
    %865 = vmatprep.subr.mxu0 0.0
    %v866 = vand.u32 %v740, 4294901760
    %v867 = vsub.f32 %v740, %v866
    %v868 = vand.u32 %v867, 4294901760
    %v869 = vsub.f32 %v867, %v868
    %v870 = vand.u32 %v869, 4294901760
    %871 = vmatpush1.msra.mxu0 %v870
    %872 = vmatprep.subr.mxu0 0.0
    %v873 = vand.u32 %v741, 4294901760
    %v874 = vsub.f32 %v741, %v873
    %v875 = vand.u32 %v874, 4294901760
    %v876 = vsub.f32 %v874, %v875
    %v877 = vand.u32 %v876, 4294901760
    %878 = vmatpush1.msra.mxu0 %v877
    %879 = vmatprep.subr.mxu0 0.0
    %v880 = vand.u32 %v742, 4294901760
    %v881 = vsub.f32 %v742, %v880
    %v882 = vand.u32 %v881, 4294901760
    %v883 = vsub.f32 %v881, %v882
    %v884 = vand.u32 %v883, 4294901760
    %885 = vmatpush1.msra.mxu0 %v884
    %886 = vmatprep.subr.mxu0 0.0
    %v887 = vand.u32 %v743, 4294901760
    %v888 = vsub.f32 %v743, %v887
    %v889 = vand.u32 %v888, 4294901760
    %v890 = vsub.f32 %v888, %v889
    %v891 = vand.u32 %v890, 4294901760
    %892 = vmatpush1.msra.mxu0 %v891
    %893 = vmatprep.subr.mxu0 0.0
    %v894 = vand.u32 %v744, 4294901760
    %v895 = vsub.f32 %v744, %v894
    %v896 = vand.u32 %v895, 4294901760
    %v897 = vsub.f32 %v895, %v896
    %v898 = vand.u32 %v897, 4294901760
    %899 = vmatpush1.msra.mxu0 %v898
    %900 = vmatprep.subr.mxu0 0.0
    %v901 = vand.u32 %v745, 4294901760
    %v902 = vsub.f32 %v745, %v901
    %v903 = vand.u32 %v902, 4294901760
    %v904 = vsub.f32 %v902, %v903
    %v905 = vand.u32 %v904, 4294901760
    %906 = vmatpush1.msra.mxu0 %v905
    %907 = vmatprep.subr.mxu0 0.0
    %v908 = vand.u32 %v746, 4294901760
    %v909 = vsub.f32 %v746, %v908
    %v910 = vand.u32 %v909, 4294901760
    %v911 = vsub.f32 %v909, %v910
    %v912 = vand.u32 %v911, 4294901760
    %913 = vmatpush1.msra.mxu0 %v912
    %914 = vmatprep.subr.mxu0 0.0
    %v915 = vand.u32 %v747, 4294901760
    %v916 = vsub.f32 %v747, %v915
    %v917 = vand.u32 %v916, 4294901760
    %v918 = vsub.f32 %v916, %v917
    %v919 = vand.u32 %v918, 4294901760
    %920 = vmatpush1.msra.mxu0 %v919
    %921 = vmatprep.subr.mxu0 0.0
    %v922 = vand.u32 %v748, 4294901760
    %v923 = vsub.f32 %v748, %v922
    %v924 = vand.u32 %v923, 4294901760
    %v925 = vsub.f32 %v923, %v924
    %v926 = vand.u32 %v925, 4294901760
    %927 = vmatpush1.msra.mxu0 %v926
    %928 = vmatprep.subr.mxu0 0.0
    %v929 = vand.u32 %v749, 4294901760
    %v930 = vsub.f32 %v749, %v929
    %v931 = vand.u32 %v930, 4294901760
    %v932 = vsub.f32 %v930, %v931
    %v933 = vand.u32 %v932, 4294901760
    %934 = vmatpush1.msra.mxu0 %v933
    %935 = vmatprep.subr.mxu0 0.0
    %v936 = vand.u32 %v750, 4294901760
    %v937 = vsub.f32 %v750, %v936
    %v938 = vand.u32 %v937, 4294901760
    %v939 = vsub.f32 %v937, %v938
    %v940 = vand.u32 %v939, 4294901760
    %941 = vmatpush1.msra.mxu0 %v940
    %942 = vmatprep.subr.mxu0 0.0
    %v943 = vand.u32 %v751, 4294901760
    %v944 = vsub.f32 %v751, %v943
    %v945 = vand.u32 %v944, 4294901760
    %v946 = vsub.f32 %v944, %v945
    %v947 = vand.u32 %v946, 4294901760
    %948 = vmatpush1.msra.mxu0 %v947
    %949 = vmatprep.subr.mxu0 0.0
    %v950 = vand.u32 %v752, 4294901760
    %v951 = vsub.f32 %v752, %v950
    %v952 = vand.u32 %v951, 4294901760
    %v953 = vsub.f32 %v951, %v952
    %v954 = vand.u32 %v953, 4294901760
    %955 = vmatpush1.msra.mxu0 %v954
    %956 = vmatprep.subr.mxu0 0.0
    %957 = vmatpush1.msra.mxu0 0.0
    %958 = vmatprep.subr.mxu0 0.0
    %959 = vmatpush1.msra.mxu0 0.0
    %960 = vmatprep.subr.mxu0 0.0
    %961 = vmatpush1.msra.mxu0 0.0
    %962 = vmatprep.subr.mxu0 0.0
    %963 = vmatpush1.msra.mxu0 0.0
    %964 = vmatprep.subr.mxu0 0.0
    %965 = vmatpush1.msra.mxu0 0.0
    %966 = vmatprep.subr.mxu0 0.0
    %967 = vmatpush1.msra.mxu0 0.0
    %968 = vmatprep.subr.mxu0 0.0
    %969 = vmatpush1.msra.mxu0 0.0
    %970 = vmatprep.subr.mxu0 0.0
    %971 = vmatpush1.msra.mxu0 0.0
    %972 = vmatprep.subr.mxu0 0.0
    %973 = vmatpush1.msra.mxu0 0.0
    %974 = vmatprep.subr.mxu0 0.0
    %975 = vmatpush1.msra.mxu0 0.0
    %976 = vmatprep.subr.mxu0 0.0
    %977 = vmatpush1.msra.mxu0 0.0
    %978 = vmatprep.subr.mxu0 0.0
    %979 = vmatpush1.msra.mxu0 0.0
    %980 = vmatprep.subr.mxu0 0.0
    %981 = vmatpush1.msra.mxu0 0.0
    %982 = vmatprep.subr.mxu0 0.0
    %983 = vmatpush1.msra.mxu0 0.0
    %984 = vmatprep.subr.mxu0 0.0
    %985 = vmatpush1.msra.mxu0 0.0
    %986 = vmatprep.subr.mxu0 0.0
    %987 = vmatpush1.msra.mxu0 0.0
    %988 = vmatprep.mubr.f32.mxu0 0.0
    %v989 = vand.u32 %v699, 4294901760
    %990 = vmatmul.mubr.f32.gmra.mrb[0].mxu0 %v989
    %v991 = vpop.f32.mrb[0].mxu0
    %v992 = vadd.f32 %v841, %v991
    %v993 = vpop.f32.mrb[0].mxu0
    %994 = vdwg.mxu0
    %995 = vmatprep.subr.mxu0 0.0
    %v996 = vand.u32 %v737, 4294901760
    %v997 = vsub.f32 %v737, %v996
    %998 = vmatpush1.msra.mxu0 %v997
    %999 = vmatprep.subr.mxu0 0.0
    %v1000 = vand.u32 %v738, 4294901760
    %v1001 = vsub.f32 %v738, %v1000
    %1002 = vmatpush1.msra.mxu0 %v1001
    %1003 = vmatprep.subr.mxu0 0.0
    %v1004 = vand.u32 %v739, 4294901760
    %v1005 = vsub.f32 %v739, %v1004
    %1006 = vmatpush1.msra.mxu0 %v1005
    %1007 = vmatprep.subr.mxu0 0.0
    %v1008 = vand.u32 %v740, 4294901760
    %v1009 = vsub.f32 %v740, %v1008
    %1010 = vmatpush1.msra.mxu0 %v1009
    %1011 = vmatprep.subr.mxu0 0.0
    %v1012 = vand.u32 %v741, 4294901760
    %v1013 = vsub.f32 %v741, %v1012
    %1014 = vmatpush1.msra.mxu0 %v1013
    %1015 = vmatprep.subr.mxu0 0.0
    %v1016 = vand.u32 %v742, 4294901760
    %v1017 = vsub.f32 %v742, %v1016
    %1018 = vmatpush1.msra.mxu0 %v1017
    %1019 = vmatprep.subr.mxu0 0.0
    %v1020 = vand.u32 %v743, 4294901760
    %v1021 = vsub.f32 %v743, %v1020
    %1022 = vmatpush1.msra.mxu0 %v1021
    %1023 = vmatprep.subr.mxu0 0.0
    %v1024 = vand.u32 %v744, 4294901760
    %v1025 = vsub.f32 %v744, %v1024
    %1026 = vmatpush1.msra.mxu0 %v1025
    %1027 = vmatprep.subr.mxu0 0.0
    %v1028 = vand.u32 %v745, 4294901760
    %v1029 = vsub.f32 %v745, %v1028
    %1030 = vmatpush1.msra.mxu0 %v1029
    %1031 = vmatprep.subr.mxu0 0.0
    %v1032 = vand.u32 %v746, 4294901760
    %v1033 = vsub.f32 %v746, %v1032
    %1034 = vmatpush1.msra.mxu0 %v1033
    %1035 = vmatprep.subr.mxu0 0.0
    %v1036 = vand.u32 %v747, 4294901760
    %v1037 = vsub.f32 %v747, %v1036
    %1038 = vmatpush1.msra.mxu0 %v1037
    %1039 = vmatprep.subr.mxu0 0.0
    %v1040 = vand.u32 %v748, 4294901760
    %v1041 = vsub.f32 %v748, %v1040
    %1042 = vmatpush1.msra.mxu0 %v1041
    %1043 = vmatprep.subr.mxu0 0.0
    %v1044 = vand.u32 %v749, 4294901760
    %v1045 = vsub.f32 %v749, %v1044
    %1046 = vmatpush1.msra.mxu0 %v1045
    %1047 = vmatprep.subr.mxu0 0.0
    %v1048 = vand.u32 %v750, 4294901760
    %v1049 = vsub.f32 %v750, %v1048
    %1050 = vmatpush1.msra.mxu0 %v1049
    %1051 = vmatprep.subr.mxu0 0.0
    %v1052 = vand.u32 %v751, 4294901760
    %v1053 = vsub.f32 %v751, %v1052
    %1054 = vmatpush1.msra.mxu0 %v1053
    %1055 = vmatprep.subr.mxu0 0.0
    %v1056 = vand.u32 %v752, 4294901760
    %v1057 = vsub.f32 %v752, %v1056
    %1058 = vmatpush1.msra.mxu0 %v1057
    %1059 = vmatprep.subr.mxu0 0.0
    %1060 = vmatpush1.msra.mxu0 0.0
    %1061 = vmatprep.subr.mxu0 0.0
    %1062 = vmatpush1.msra.mxu0 0.0
    %1063 = vmatprep.subr.mxu0 0.0
    %1064 = vmatpush1.msra.mxu0 0.0
    %1065 = vmatprep.subr.mxu0 0.0
    %1066 = vmatpush1.msra.mxu0 0.0
    %1067 = vmatprep.subr.mxu0 0.0
    %1068 = vmatpush1.msra.mxu0 0.0
    %1069 = vmatprep.subr.mxu0 0.0
    %1070 = vmatpush1.msra.mxu0 0.0
    %1071 = vmatprep.subr.mxu0 0.0
    %1072 = vmatpush1.msra.mxu0 0.0
    %1073 = vmatprep.subr.mxu0 0.0
    %1074 = vmatpush1.msra.mxu0 0.0
    %1075 = vmatprep.subr.mxu0 0.0
    %1076 = vmatpush1.msra.mxu0 0.0
    %1077 = vmatprep.subr.mxu0 0.0
    %1078 = vmatpush1.msra.mxu0 0.0
    %1079 = vmatprep.subr.mxu0 0.0
    %1080 = vmatpush1.msra.mxu0 0.0
    %1081 = vmatprep.subr.mxu0 0.0
    %1082 = vmatpush1.msra.mxu0 0.0
    %1083 = vmatprep.subr.mxu0 0.0
    %1084 = vmatpush1.msra.mxu0 0.0
    %1085 = vmatprep.subr.mxu0 0.0
    %1086 = vmatpush1.msra.mxu0 0.0
    %1087 = vmatprep.subr.mxu0 0.0
    %1088 = vmatpush1.msra.mxu0 0.0
    %1089 = vmatprep.subr.mxu0 0.0
    %1090 = vmatpush1.msra.mxu0 0.0
    %1091 = vmatprep.mubr.f32.mxu0 0.0
    %v1092 = vand.u32 %v699, 4294901760
    %v1093 = vsub.f32 %v699, %v1092
    %1094 = vmatmul.mubr.f32.gmra.mrb[0].mxu0 %v1093
    %v1095 = vpop.f32.mrb[0].mxu0
    %v1096 = vadd.f32 %v992, %v1095
    %v1097 = vpop.f32.mrb[0].mxu0
    %1098 = vdwg.mxu0
    %1099 = vmatprep.subr.mxu0 0.0
    %v1100 = vand.u32 %v737, 4294901760
    %1101 = vmatpush1.msra.mxu0 %v1100
    %1102 = vmatprep.subr.mxu0 0.0
    %v1103 = vand.u32 %v738, 4294901760
    %1104 = vmatpush1.msra.mxu0 %v1103
    %1105 = vmatprep.subr.mxu0 0.0
    %v1106 = vand.u32 %v739, 4294901760
    %1107 = vmatpush1.msra.mxu0 %v1106
    %1108 = vmatprep.subr.mxu0 0.0
    %v1109 = vand.u32 %v740, 4294901760
    %1110 = vmatpush1.msra.mxu0 %v1109
    %1111 = vmatprep.subr.mxu0 0.0
    %v1112 = vand.u32 %v741, 4294901760
    %1113 = vmatpush1.msra.mxu0 %v1112
    %1114 = vmatprep.subr.mxu0 0.0
    %v1115 = vand.u32 %v742, 4294901760
    %1116 = vmatpush1.msra.mxu0 %v1115
    %1117 = vmatprep.subr.mxu0 0.0
    %v1118 = vand.u32 %v743, 4294901760
    %1119 = vmatpush1.msra.mxu0 %v1118
    %1120 = vmatprep.subr.mxu0 0.0
    %v1121 = vand.u32 %v744, 4294901760
    %1122 = vmatpush1.msra.mxu0 %v1121
    %1123 = vmatprep.subr.mxu0 0.0
    %v1124 = vand.u32 %v745, 4294901760
    %1125 = vmatpush1.msra.mxu0 %v1124
    %1126 = vmatprep.subr.mxu0 0.0
    %v1127 = vand.u32 %v746, 4294901760
    %1128 = vmatpush1.msra.mxu0 %v1127
    %1129 = vmatprep.subr.mxu0 0.0
    %v1130 = vand.u32 %v747, 4294901760
    %1131 = vmatpush1.msra.mxu0 %v1130
    %1132 = vmatprep.subr.mxu0 0.0
    %v1133 = vand.u32 %v748, 4294901760
    %1134 = vmatpush1.msra.mxu0 %v1133
    %1135 = vmatprep.subr.mxu0 0.0
    %v1136 = vand.u32 %v749, 4294901760
    %1137 = vmatpush1.msra.mxu0 %v1136
    %1138 = vmatprep.subr.mxu0 0.0
    %v1139 = vand.u32 %v750, 4294901760
    %1140 = vmatpush1.msra.mxu0 %v1139
    %1141 = vmatprep.subr.mxu0 0.0
    %v1142 = vand.u32 %v751, 4294901760
    %1143 = vmatpush1.msra.mxu0 %v1142
    %1144 = vmatprep.subr.mxu0 0.0
    %v1145 = vand.u32 %v752, 4294901760
    %1146 = vmatpush1.msra.mxu0 %v1145
    %1147 = vmatprep.subr.mxu0 0.0
    %1148 = vmatpush1.msra.mxu0 0.0
    %1149 = vmatprep.subr.mxu0 0.0
    %1150 = vmatpush1.msra.mxu0 0.0
    %1151 = vmatprep.subr.mxu0 0.0
    %1152 = vmatpush1.msra.mxu0 0.0
    %1153 = vmatprep.subr.mxu0 0.0
    %1154 = vmatpush1.msra.mxu0 0.0
    %1155 = vmatprep.subr.mxu0 0.0
    %1156 = vmatpush1.msra.mxu0 0.0
    %1157 = vmatprep.subr.mxu0 0.0
    %1158 = vmatpush1.msra.mxu0 0.0
    %1159 = vmatprep.subr.mxu0 0.0
    %1160 = vmatpush1.msra.mxu0 0.0
    %1161 = vmatprep.subr.mxu0 0.0
    %1162 = vmatpush1.msra.mxu0 0.0
    %1163 = vmatprep.subr.mxu0 0.0
    %1164 = vmatpush1.msra.mxu0 0.0
    %1165 = vmatprep.subr.mxu0 0.0
    %1166 = vmatpush1.msra.mxu0 0.0
    %1167 = vmatprep.subr.mxu0 0.0
    %1168 = vmatpush1.msra.mxu0 0.0
    %1169 = vmatprep.subr.mxu0 0.0
    %1170 = vmatpush1.msra.mxu0 0.0
    %1171 = vmatprep.subr.mxu0 0.0
    %1172 = vmatpush1.msra.mxu0 0.0
    %1173 = vmatprep.subr.mxu0 0.0
    %1174 = vmatpush1.msra.mxu0 0.0
    %1175 = vmatprep.subr.mxu0 0.0
    %1176 = vmatpush1.msra.mxu0 0.0
    %1177 = vmatprep.subr.mxu0 0.0
    %1178 = vmatpush1.msra.mxu0 0.0
    %1179 = vmatprep.mubr.f32.mxu0 0.0
    %v1180 = vand.u32 %v699, 4294901760
    %v1181 = vsub.f32 %v699, %v1180
    %v1182 = vand.u32 %v1181, 4294901760
    %1183 = vmatmul.mubr.f32.gmra.mrb[0].mxu0 %v1182
    %v1184 = vpop.f32.mrb[0].mxu0
    %v1185 = vadd.f32 %v1096, %v1184
    %v1186 = vpop.f32.mrb[0].mxu0
    %1187 = vdwg.mxu0
    %1188 = vmatprep.subr.mxu0 0.0
    %v1189 = vand.u32 %v737, 4294901760
    %v1190 = vsub.f32 %v737, %v1189
    %v1191 = vand.u32 %v1190, 4294901760
    %1192 = vmatpush1.msra.mxu0 %v1191
    %1193 = vmatprep.subr.mxu0 0.0
    %v1194 = vand.u32 %v738, 4294901760
    %v1195 = vsub.f32 %v738, %v1194
    %v1196 = vand.u32 %v1195, 4294901760
    %1197 = vmatpush1.msra.mxu0 %v1196
    %1198 = vmatprep.subr.mxu0 0.0
    %v1199 = vand.u32 %v739, 4294901760
    %v1200 = vsub.f32 %v739, %v1199
    %v1201 = vand.u32 %v1200, 4294901760
    %1202 = vmatpush1.msra.mxu0 %v1201
    %1203 = vmatprep.subr.mxu0 0.0
    %v1204 = vand.u32 %v740, 4294901760
    %v1205 = vsub.f32 %v740, %v1204
    %v1206 = vand.u32 %v1205, 4294901760
    %1207 = vmatpush1.msra.mxu0 %v1206
    %1208 = vmatprep.subr.mxu0 0.0
    %v1209 = vand.u32 %v741, 4294901760
    %v1210 = vsub.f32 %v741, %v1209
    %v1211 = vand.u32 %v1210, 4294901760
    %1212 = vmatpush1.msra.mxu0 %v1211
    %1213 = vmatprep.subr.mxu0 0.0
    %v1214 = vand.u32 %v742, 4294901760
    %v1215 = vsub.f32 %v742, %v1214
    %v1216 = vand.u32 %v1215, 4294901760
    %1217 = vmatpush1.msra.mxu0 %v1216
    %1218 = vmatprep.subr.mxu0 0.0
    %v1219 = vand.u32 %v743, 4294901760
    %v1220 = vsub.f32 %v743, %v1219
    %v1221 = vand.u32 %v1220, 4294901760
    %1222 = vmatpush1.msra.mxu0 %v1221
    %1223 = vmatprep.subr.mxu0 0.0
    %v1224 = vand.u32 %v744, 4294901760
    %v1225 = vsub.f32 %v744, %v1224
    %v1226 = vand.u32 %v1225, 4294901760
    %1227 = vmatpush1.msra.mxu0 %v1226
    %1228 = vmatprep.subr.mxu0 0.0
    %v1229 = vand.u32 %v745, 4294901760
    %v1230 = vsub.f32 %v745, %v1229
    %v1231 = vand.u32 %v1230, 4294901760
    %1232 = vmatpush1.msra.mxu0 %v1231
    %1233 = vmatprep.subr.mxu0 0.0
    %v1234 = vand.u32 %v746, 4294901760
    %v1235 = vsub.f32 %v746, %v1234
    %v1236 = vand.u32 %v1235, 4294901760
    %1237 = vmatpush1.msra.mxu0 %v1236
    %1238 = vmatprep.subr.mxu0 0.0
    %v1239 = vand.u32 %v747, 4294901760
    %v1240 = vsub.f32 %v747, %v1239
    %v1241 = vand.u32 %v1240, 4294901760
    %1242 = vmatpush1.msra.mxu0 %v1241
    %1243 = vmatprep.subr.mxu0 0.0
    %v1244 = vand.u32 %v748, 4294901760
    %v1245 = vsub.f32 %v748, %v1244
    %v1246 = vand.u32 %v1245, 4294901760
    %1247 = vmatpush1.msra.mxu0 %v1246
    %1248 = vmatprep.subr.mxu0 0.0
    %v1249 = vand.u32 %v749, 4294901760
    %v1250 = vsub.f32 %v749, %v1249
    %v1251 = vand.u32 %v1250, 4294901760
    %1252 = vmatpush1.msra.mxu0 %v1251
    %1253 = vmatprep.subr.mxu0 0.0
    %v1254 = vand.u32 %v750, 4294901760
    %v1255 = vsub.f32 %v750, %v1254
    %v1256 = vand.u32 %v1255, 4294901760
    %1257 = vmatpush1.msra.mxu0 %v1256
    %1258 = vmatprep.subr.mxu0 0.0
    %v1259 = vand.u32 %v751, 4294901760
    %v1260 = vsub.f32 %v751, %v1259
    %v1261 = vand.u32 %v1260, 4294901760
    %1262 = vmatpush1.msra.mxu0 %v1261
    %1263 = vmatprep.subr.mxu0 0.0
    %v1264 = vand.u32 %v752, 4294901760
    %v1265 = vsub.f32 %v752, %v1264
    %v1266 = vand.u32 %v1265, 4294901760
    %1267 = vmatpush1.msra.mxu0 %v1266
    %1268 = vmatprep.subr.mxu0 0.0
    %1269 = vmatpush1.msra.mxu0 0.0
    %1270 = vmatprep.subr.mxu0 0.0
    %1271 = vmatpush1.msra.mxu0 0.0
    %1272 = vmatprep.subr.mxu0 0.0
    %1273 = vmatpush1.msra.mxu0 0.0
    %1274 = vmatprep.subr.mxu0 0.0
    %1275 = vmatpush1.msra.mxu0 0.0
    %1276 = vmatprep.subr.mxu0 0.0
    %1277 = vmatpush1.msra.mxu0 0.0
    %1278 = vmatprep.subr.mxu0 0.0
    %1279 = vmatpush1.msra.mxu0 0.0
    %1280 = vmatprep.subr.mxu0 0.0
    %1281 = vmatpush1.msra.mxu0 0.0
    %1282 = vmatprep.subr.mxu0 0.0
    %1283 = vmatpush1.msra.mxu0 0.0
    %1284 = vmatprep.subr.mxu0 0.0
    %1285 = vmatpush1.msra.mxu0 0.0
    %1286 = vmatprep.subr.mxu0 0.0
    %1287 = vmatpush1.msra.mxu0 0.0
    %1288 = vmatprep.subr.mxu0 0.0
    %1289 = vmatpush1.msra.mxu0 0.0
    %1290 = vmatprep.subr.mxu0 0.0
    %1291 = vmatpush1.msra.mxu0 0.0
    %1292 = vmatprep.subr.mxu0 0.0
    %1293 = vmatpush1.msra.mxu0 0.0
    %1294 = vmatprep.subr.mxu0 0.0
    %1295 = vmatpush1.msra.mxu0 0.0
    %1296 = vmatprep.subr.mxu0 0.0
    %1297 = vmatpush1.msra.mxu0 0.0
    %1298 = vmatprep.subr.mxu0 0.0
    %1299 = vmatpush1.msra.mxu0 0.0
    %1300 = vmatprep.mubr.f32.mxu0 0.0
    %v1301 = vand.u32 %v699, 4294901760
    %1302 = vmatmul.mubr.f32.gmra.mrb[0].mxu0 %v1301
    %v1303 = vpop.f32.mrb[0].mxu0
    %v1304 = vadd.f32 %v1185, %v1303
    %v1305 = vpop.f32.mrb[0].mxu0
    %1306 = vdwg.mxu0
    %1307 = vmatprep.subr.mxu0 0.0
    %v1308 = vand.u32 %v737, 4294901760
    %1309 = vmatpush1.msra.mxu0 %v1308
    %1310 = vmatprep.subr.mxu0 0.0
    %v1311 = vand.u32 %v738, 4294901760
    %1312 = vmatpush1.msra.mxu0 %v1311
    %1313 = vmatprep.subr.mxu0 0.0
    %v1314 = vand.u32 %v739, 4294901760
    %1315 = vmatpush1.msra.mxu0 %v1314
    %1316 = vmatprep.subr.mxu0 0.0
    %v1317 = vand.u32 %v740, 4294901760
    %1318 = vmatpush1.msra.mxu0 %v1317
    %1319 = vmatprep.subr.mxu0 0.0
    %v1320 = vand.u32 %v741, 4294901760
    %1321 = vmatpush1.msra.mxu0 %v1320
    %1322 = vmatprep.subr.mxu0 0.0
    %v1323 = vand.u32 %v742, 4294901760
    %1324 = vmatpush1.msra.mxu0 %v1323
    %1325 = vmatprep.subr.mxu0 0.0
    %v1326 = vand.u32 %v743, 4294901760
    %1327 = vmatpush1.msra.mxu0 %v1326
    %1328 = vmatprep.subr.mxu0 0.0
    %v1329 = vand.u32 %v744, 4294901760
    %1330 = vmatpush1.msra.mxu0 %v1329
    %1331 = vmatprep.subr.mxu0 0.0
    %v1332 = vand.u32 %v745, 4294901760
    %1333 = vmatpush1.msra.mxu0 %v1332
    %1334 = vmatprep.subr.mxu0 0.0
    %v1335 = vand.u32 %v746, 4294901760
    %1336 = vmatpush1.msra.mxu0 %v1335
    %1337 = vmatprep.subr.mxu0 0.0
    %v1338 = vand.u32 %v747, 4294901760
    %1339 = vmatpush1.msra.mxu0 %v1338
    %1340 = vmatprep.subr.mxu0 0.0
    %v1341 = vand.u32 %v748, 4294901760
    %1342 = vmatpush1.msra.mxu0 %v1341
    %1343 = vmatprep.subr.mxu0 0.0
    %v1344 = vand.u32 %v749, 4294901760
    %1345 = vmatpush1.msra.mxu0 %v1344
    %1346 = vmatprep.subr.mxu0 0.0
    %v1347 = vand.u32 %v750, 4294901760
    %1348 = vmatpush1.msra.mxu0 %v1347
    %1349 = vmatprep.subr.mxu0 0.0
    %v1350 = vand.u32 %v751, 4294901760
    %1351 = vmatpush1.msra.mxu0 %v1350
    %1352 = vmatprep.subr.mxu0 0.0
    %v1353 = vand.u32 %v752, 4294901760
    %1354 = vmatpush1.msra.mxu0 %v1353
    %1355 = vmatprep.subr.mxu0 0.0
    %1356 = vmatpush1.msra.mxu0 0.0
    %1357 = vmatprep.subr.mxu0 0.0
    %1358 = vmatpush1.msra.mxu0 0.0
    %1359 = vmatprep.subr.mxu0 0.0
    %1360 = vmatpush1.msra.mxu0 0.0
    %1361 = vmatprep.subr.mxu0 0.0
    %1362 = vmatpush1.msra.mxu0 0.0
    %1363 = vmatprep.subr.mxu0 0.0
    %1364 = vmatpush1.msra.mxu0 0.0
    %1365 = vmatprep.subr.mxu0 0.0
    %1366 = vmatpush1.msra.mxu0 0.0
    %1367 = vmatprep.subr.mxu0 0.0
    %1368 = vmatpush1.msra.mxu0 0.0
    %1369 = vmatprep.subr.mxu0 0.0
    %1370 = vmatpush1.msra.mxu0 0.0
    %1371 = vmatprep.subr.mxu0 0.0
    %1372 = vmatpush1.msra.mxu0 0.0
    %1373 = vmatprep.subr.mxu0 0.0
    %1374 = vmatpush1.msra.mxu0 0.0
    %1375 = vmatprep.subr.mxu0 0.0
    %1376 = vmatpush1.msra.mxu0 0.0
    %1377 = vmatprep.subr.mxu0 0.0
    %1378 = vmatpush1.msra.mxu0 0.0
    %1379 = vmatprep.subr.mxu0 0.0
    %1380 = vmatpush1.msra.mxu0 0.0
    %1381 = vmatprep.subr.mxu0 0.0
    %1382 = vmatpush1.msra.mxu0 0.0
    %1383 = vmatprep.subr.mxu0 0.0
    %1384 = vmatpush1.msra.mxu0 0.0
    %1385 = vmatprep.subr.mxu0 0.0
    %1386 = vmatpush1.msra.mxu0 0.0
    %1387 = vmatprep.mubr.f32.mxu0 0.0
    %v1388 = vand.u32 %v699, 4294901760
    %1389 = vmatmul.mubr.f32.gmra.mrb[0].mxu0 %v1388
    %v1390 = vpop.f32.mrb[0].mxu0
    %v1391 = vadd.f32 %v1304, %v1390
    %v1392 = vpop.f32.mrb[0].mxu0
    %1393 = vdwg.mxu0
    %v1394 = vmax.f32 %v1391, 0.0
    %1395 = vadd.xlane.f32.xlu0 %v1394
    %v1396 = vpop.xlane.xlu0 %1395
    %v1397 = vrot.slane %v1396, 4
    %v1398 = vadd.f32 %v1396, %v1397
    %v1399 = vrot.slane %v1398, 2
    %v1400 = vadd.f32 %v1398, %v1399
    %v1401 = vrot.slane %v1400, 1
    %v1402 = vadd.f32 %v1400, %v1401
    %s1403 = vtos %v1402
    %v1404 = vstv %s1403
    %v1405 = vmul.f32 %v1404, %v710
    %v1406 = vsub.f32 %v1394, %v1405
    %v1407 = vmul.f32 %v1406, %v1406
    %1408 = vadd.xlane.f32.xlu0 %v1407
    %v1409 = vpop.xlane.xlu0 %1408
    %v1410 = vrot.slane %v1409, 4
    %v1411 = vadd.f32 %v1409, %v1410
    %v1412 = vrot.slane %v1411, 2
    %v1413 = vadd.f32 %v1411, %v1412
    %v1414 = vrot.slane %v1413, 1
    %v1415 = vadd.f32 %v1413, %v1414
    %s1416 = vtos %v1415
    %v1417 = vstv %s1416
    %v1418 = vmul.f32 %v1417, %v724
    %v1419 = vrsqrt.pop %v1418
    %v1420 = vmul.f32 %v1418, %v1419
    %vm1421 = vcmp.eq.f32.partialorder %v1418, inf
    %v1422 = vsel %vm1421, %v1418, %v1420
    %vm1423 = vcmp.eq.f32.partialorder %v1418, 0.0
    %v1424 = vand.u32 %v1418, 2147483648
    %v1425 = vsel %vm1423, %v1424, %v1422
    %s1426 = vtos %v1425
    %s1427 = scalar_lea.smem [#allocation9], 1
    %1428 = sst [smem:[%s1427]] %s1426
    %s1429 = scalar_lea.vmem [#allocation6], 256
    %v1430 = vld [vmem:[%s1429] sm:$0xff]
    %v1431 = vld [vmem:[%s1429 + $0x8] sm:$0xff]
    %v1432 = vld [vmem:[%s1429 + $0x10] sm:$0xff]
    %v1433 = vld [vmem:[%s1429 + $0x18] sm:$0xff]
    %v1434 = vld [vmem:[%s1429 + $0x20] sm:$0xff]
    %v1435 = vld [vmem:[%s1429 + $0x28] sm:$0xff]
    %v1436 = vld [vmem:[%s1429 + $0x30] sm:$0xff]
    %v1437 = vld [vmem:[%s1429 + $0x38] sm:$0xff]
    %v1438 = vld [vmem:[%s1429 + $0x40] sm:$0xff]
    %v1439 = vld [vmem:[%s1429 + $0x48] sm:$0xff]
    %v1440 = vld [vmem:[%s1429 + $0x50] sm:$0xff]
    %v1441 = vld [vmem:[%s1429 + $0x58] sm:$0xff]
    %v1442 = vld [vmem:[%s1429 + $0x60] sm:$0xff]
    %v1443 = vld [vmem:[%s1429 + $0x68] sm:$0xff]
    %v1444 = vld [vmem:[%s1429 + $0x70] sm:$0xff]
    %v1445 = vld [vmem:[%s1429 + $0x78] sm:$0xff]
    %1446 = vmatprep.subr.mxu0 0.0
    %v1447 = vand.u32 %v1430, 4294901760
    %1448 = vmatpush1.msra.mxu0 %v1447
    %1449 = vmatprep.subr.mxu0 0.0
    %v1450 = vand.u32 %v1431, 4294901760
    %1451 = vmatpush1.msra.mxu0 %v1450
    %1452 = vmatprep.subr.mxu0 0.0
    %v1453 = vand.u32 %v1432, 4294901760
    %1454 = vmatpush1.msra.mxu0 %v1453
    %1455 = vmatprep.subr.mxu0 0.0
    %v1456 = vand.u32 %v1433, 4294901760
    %1457 = vmatpush1.msra.mxu0 %v1456
    %1458 = vmatprep.subr.mxu0 0.0
    %v1459 = vand.u32 %v1434, 4294901760
    %1460 = vmatpush1.msra.mxu0 %v1459
    %1461 = vmatprep.subr.mxu0 0.0
    %v1462 = vand.u32 %v1435, 4294901760
    %1463 = vmatpush1.msra.mxu0 %v1462
    %1464 = vmatprep.subr.mxu0 0.0
    %v1465 = vand.u32 %v1436, 4294901760
    %1466 = vmatpush1.msra.mxu0 %v1465
    %1467 = vmatprep.subr.mxu0 0.0
    %v1468 = vand.u32 %v1437, 4294901760
    %1469 = vmatpush1.msra.mxu0 %v1468
    %1470 = vmatprep.subr.mxu0 0.0
    %v1471 = vand.u32 %v1438, 4294901760
    %1472 = vmatpush1.msra.mxu0 %v1471
    %1473 = vmatprep.subr.mxu0 0.0
    %v1474 = vand.u32 %v1439, 4294901760
    %1475 = vmatpush1.msra.mxu0 %v1474
    %1476 = vmatprep.subr.mxu0 0.0
    %v1477 = vand.u32 %v1440, 4294901760
    %1478 = vmatpush1.msra.mxu0 %v1477
    %1479 = vmatprep.subr.mxu0 0.0
    %v1480 = vand.u32 %v1441, 4294901760
    %1481 = vmatpush1.msra.mxu0 %v1480
    %1482 = vmatprep.subr.mxu0 0.0
    %v1483 = vand.u32 %v1442, 4294901760
    %1484 = vmatpush1.msra.mxu0 %v1483
    %1485 = vmatprep.subr.mxu0 0.0
    %v1486 = vand.u32 %v1443, 4294901760
    %1487 = vmatpush1.msra.mxu0 %v1486
    %1488 = vmatprep.subr.mxu0 0.0
    %v1489 = vand.u32 %v1444, 4294901760
    %1490 = vmatpush1.msra.mxu0 %v1489
    %1491 = vmatprep.subr.mxu0 0.0
    %v1492 = vand.u32 %v1445, 4294901760
    %1493 = vmatpush1.msra.mxu0 %v1492
    %1494 = vmatprep.subr.mxu0 0.0
    %1495 = vmatpush1.msra.mxu0 0.0
    %1496 = vmatprep.subr.mxu0 0.0
    %1497 = vmatpush1.msra.mxu0 0.0
    %1498 = vmatprep.subr.mxu0 0.0
    %1499 = vmatpush1.msra.mxu0 0.0
    %1500 = vmatprep.subr.mxu0 0.0
    %1501 = vmatpush1.msra.mxu0 0.0
    %1502 = vmatprep.subr.mxu0 0.0
    %1503 = vmatpush1.msra.mxu0 0.0
    %1504 = vmatprep.subr.mxu0 0.0
    %1505 = vmatpush1.msra.mxu0 0.0
    %1506 = vmatprep.subr.mxu0 0.0
    %1507 = vmatpush1.msra.mxu0 0.0
    %1508 = vmatprep.subr.mxu0 0.0
    %1509 = vmatpush1.msra.mxu0 0.0
    %1510 = vmatprep.subr.mxu0 0.0
    %1511 = vmatpush1.msra.mxu0 0.0
    %1512 = vmatprep.subr.mxu0 0.0
    %1513 = vmatpush1.msra.mxu0 0.0
    %1514 = vmatprep.subr.mxu0 0.0
    %1515 = vmatpush1.msra.mxu0 0.0
    %1516 = vmatprep.subr.mxu0 0.0
    %1517 = vmatpush1.msra.mxu0 0.0
    %1518 = vmatprep.subr.mxu0 0.0
    %1519 = vmatpush1.msra.mxu0 0.0
    %1520 = vmatprep.subr.mxu0 0.0
    %1521 = vmatpush1.msra.mxu0 0.0
    %1522 = vmatprep.subr.mxu0 0.0
    %1523 = vmatpush1.msra.mxu0 0.0
    %1524 = vmatprep.subr.mxu0 0.0
    %1525 = vmatpush1.msra.mxu0 0.0
    %1526 = vmatprep.mubr.f32.mxu0 0.0
    %v1527 = vand.u32 %v1394, 4294901760
    %v1528 = vsub.f32 %v1394, %v1527
    %v1529 = vand.u32 %v1528, 4294901760
    %v1530 = vsub.f32 %v1528, %v1529
    %v1531 = vand.u32 %v1530, 4294901760
    %1532 = vmatmul.mubr.f32.gmra.mrb[0].mxu0 %v1531
    %v1533 = vpop.f32.mrb[0].mxu0
    %v1534 = vadd.f32 0.0, %v1533
    %v1535 = vpop.f32.mrb[0].mxu0
    %1536 = vdwg.mxu0
    %1537 = vmatprep.subr.mxu0 0.0
    %v1538 = vand.u32 %v1430, 4294901760
    %v1539 = vsub.f32 %v1430, %v1538
    %v1540 = vand.u32 %v1539, 4294901760
    %v1541 = vsub.f32 %v1539, %v1540
    %v1542 = vand.u32 %v1541, 4294901760
    %1543 = vmatpush1.msra.mxu0 %v1542
    %1544 = vmatprep.subr.mxu0 0.0
    %v1545 = vand.u32 %v1431, 4294901760
    %v1546 = vsub.f32 %v1431, %v1545
    %v1547 = vand.u32 %v1546, 4294901760
    %v1548 = vsub.f32 %v1546, %v1547
    %v1549 = vand.u32 %v1548, 4294901760
    %1550 = vmatpush1.msra.mxu0 %v1549
    %1551 = vmatprep.subr.mxu0 0.0
    %v1552 = vand.u32 %v1432, 4294901760
    %v1553 = vsub.f32 %v1432, %v1552
    %v1554 = vand.u32 %v1553, 4294901760
    %v1555 = vsub.f32 %v1553, %v1554
    %v1556 = vand.u32 %v1555, 4294901760
    %1557 = vmatpush1.msra.mxu0 %v1556
    %1558 = vmatprep.subr.mxu0 0.0
    %v1559 = vand.u32 %v1433, 4294901760
    %v1560 = vsub.f32 %v1433, %v1559
    %v1561 = vand.u32 %v1560, 4294901760
    %v1562 = vsub.f32 %v1560, %v1561
    %v1563 = vand.u32 %v1562, 4294901760
    %1564 = vmatpush1.msra.mxu0 %v1563
    %1565 = vmatprep.subr.mxu0 0.0
    %v1566 = vand.u32 %v1434, 4294901760
    %v1567 = vsub.f32 %v1434, %v1566
    %v1568 = vand.u32 %v1567, 4294901760
    %v1569 = vsub.f32 %v1567, %v1568
    %v1570 = vand.u32 %v1569, 4294901760
    %1571 = vmatpush1.msra.mxu0 %v1570
    %1572 = vmatprep.subr.mxu0 0.0
    %v1573 = vand.u32 %v1435, 4294901760
    %v1574 = vsub.f32 %v1435, %v1573
    %v1575 = vand.u32 %v1574, 4294901760
    %v1576 = vsub.f32 %v1574, %v1575
    %v1577 = vand.u32 %v1576, 4294901760
    %1578 = vmatpush1.msra.mxu0 %v1577
    %1579 = vmatprep.subr.mxu0 0.0
    %v1580 = vand.u32 %v1436, 4294901760
    %v1581 = vsub.f32 %v1436, %v1580
    %v1582 = vand.u32 %v1581, 4294901760
    %v1583 = vsub.f32 %v1581, %v1582
    %v1584 = vand.u32 %v1583, 4294901760
    %1585 = vmatpush1.msra.mxu0 %v1584
    %1586 = vmatprep.subr.mxu0 0.0
    %v1587 = vand.u32 %v1437, 4294901760
    %v1588 = vsub.f32 %v1437, %v1587
    %v1589 = vand.u32 %v1588, 4294901760
    %v1590 = vsub.f32 %v1588, %v1589
    %v1591 = vand.u32 %v1590, 4294901760
    %1592 = vmatpush1.msra.mxu0 %v1591
    %1593 = vmatprep.subr.mxu0 0.0
    %v1594 = vand.u32 %v1438, 4294901760
    %v1595 = vsub.f32 %v1438, %v1594
    %v1596 = vand.u32 %v1595, 4294901760
    %v1597 = vsub.f32 %v1595, %v1596
    %v1598 = vand.u32 %v1597, 4294901760
    %1599 = vmatpush1.msra.mxu0 %v1598
    %1600 = vmatprep.subr.mxu0 0.0
    %v1601 = vand.u32 %v1439, 4294901760
    %v1602 = vsub.f32 %v1439, %v1601
    %v1603 = vand.u32 %v1602, 4294901760
    %v1604 = vsub.f32 %v1602, %v1603
    %v1605 = vand.u32 %v1604, 4294901760
    %1606 = vmatpush1.msra.mxu0 %v1605
    %1607 = vmatprep.subr.mxu0 0.0
    %v1608 = vand.u32 %v1440, 4294901760
    %v1609 = vsub.f32 %v1440, %v1608
    %v1610 = vand.u32 %v1609, 4294901760
    %v1611 = vsub.f32 %v1609, %v1610
    %v1612 = vand.u32 %v1611, 4294901760
    %1613 = vmatpush1.msra.mxu0 %v1612
    %1614 = vmatprep.subr.mxu0 0.0
    %v1615 = vand.u32 %v1441, 4294901760
    %v1616 = vsub.f32 %v1441, %v1615
    %v1617 = vand.u32 %v1616, 4294901760
    %v1618 = vsub.f32 %v1616, %v1617
    %v1619 = vand.u32 %v1618, 4294901760
    %1620 = vmatpush1.msra.mxu0 %v1619
    %1621 = vmatprep.subr.mxu0 0.0
    %v1622 = vand.u32 %v1442, 4294901760
    %v1623 = vsub.f32 %v1442, %v1622
    %v1624 = vand.u32 %v1623, 4294901760
    %v1625 = vsub.f32 %v1623, %v1624
    %v1626 = vand.u32 %v1625, 4294901760
    %1627 = vmatpush1.msra.mxu0 %v1626
    %1628 = vmatprep.subr.mxu0 0.0
    %v1629 = vand.u32 %v1443, 4294901760
    %v1630 = vsub.f32 %v1443, %v1629
    %v1631 = vand.u32 %v1630, 4294901760
    %v1632 = vsub.f32 %v1630, %v1631
    %v1633 = vand.u32 %v1632, 4294901760
    %1634 = vmatpush1.msra.mxu0 %v1633
    %1635 = vmatprep.subr.mxu0 0.0
    %v1636 = vand.u32 %v1444, 4294901760
    %v1637 = vsub.f32 %v1444, %v1636
    %v1638 = vand.u32 %v1637, 4294901760
    %v1639 = vsub.f32 %v1637, %v1638
    %v1640 = vand.u32 %v1639, 4294901760
    %1641 = vmatpush1.msra.mxu0 %v1640
    %1642 = vmatprep.subr.mxu0 0.0
    %v1643 = vand.u32 %v1445, 4294901760
    %v1644 = vsub.f32 %v1445, %v1643
    %v1645 = vand.u32 %v1644, 4294901760
    %v1646 = vsub.f32 %v1644, %v1645
    %v1647 = vand.u32 %v1646, 4294901760
    %1648 = vmatpush1.msra.mxu0 %v1647
    %1649 = vmatprep.subr.mxu0 0.0
    %1650 = vmatpush1.msra.mxu0 0.0
    %1651 = vmatprep.subr.mxu0 0.0
    %1652 = vmatpush1.msra.mxu0 0.0
    %1653 = vmatprep.subr.mxu0 0.0
    %1654 = vmatpush1.msra.mxu0 0.0
    %1655 = vmatprep.subr.mxu0 0.0
    %1656 = vmatpush1.msra.mxu0 0.0
    %1657 = vmatprep.subr.mxu0 0.0
    %1658 = vmatpush1.msra.mxu0 0.0
    %1659 = vmatprep.subr.mxu0 0.0
    %1660 = vmatpush1.msra.mxu0 0.0
    %1661 = vmatprep.subr.mxu0 0.0
    %1662 = vmatpush1.msra.mxu0 0.0
    %1663 = vmatprep.subr.mxu0 0.0
    %1664 = vmatpush1.msra.mxu0 0.0
    %1665 = vmatprep.subr.mxu0 0.0
    %1666 = vmatpush1.msra.mxu0 0.0
    %1667 = vmatprep.subr.mxu0 0.0
    %1668 = vmatpush1.msra.mxu0 0.0
    %1669 = vmatprep.subr.mxu0 0.0
    %1670 = vmatpush1.msra.mxu0 0.0
    %1671 = vmatprep.subr.mxu0 0.0
    %1672 = vmatpush1.msra.mxu0 0.0
    %1673 = vmatprep.subr.mxu0 0.0
    %1674 = vmatpush1.msra.mxu0 0.0
    %1675 = vmatprep.subr.mxu0 0.0
    %1676 = vmatpush1.msra.mxu0 0.0
    %1677 = vmatprep.subr.mxu0 0.0
    %1678 = vmatpush1.msra.mxu0 0.0
    %1679 = vmatprep.subr.mxu0 0.0
    %1680 = vmatpush1.msra.mxu0 0.0
    %1681 = vmatprep.mubr.f32.mxu0 0.0
    %v1682 = vand.u32 %v1394, 4294901760
    %1683 = vmatmul.mubr.f32.gmra.mrb[0].mxu0 %v1682
    %v1684 = vpop.f32.mrb[0].mxu0
    %v1685 = vadd.f32 %v1534, %v1684
    %v1686 = vpop.f32.mrb[0].mxu0
    %1687 = vdwg.mxu0
    %1688 = vmatprep.subr.mxu0 0.0
    %v1689 = vand.u32 %v1430, 4294901760
    %v1690 = vsub.f32 %v1430, %v1689
    %1691 = vmatpush1.msra.mxu0 %v1690
    %1692 = vmatprep.subr.mxu0 0.0
    %v1693 = vand.u32 %v1431, 4294901760
    %v1694 = vsub.f32 %v1431, %v1693
    %1695 = vmatpush1.msra.mxu0 %v1694
    %1696 = vmatprep.subr.mxu0 0.0
    %v1697 = vand.u32 %v1432, 4294901760
    %v1698 = vsub.f32 %v1432, %v1697
    %1699 = vmatpush1.msra.mxu0 %v1698
    %1700 = vmatprep.subr.mxu0 0.0
    %v1701 = vand.u32 %v1433, 4294901760
    %v1702 = vsub.f32 %v1433, %v1701
    %1703 = vmatpush1.msra.mxu0 %v1702
    %1704 = vmatprep.subr.mxu0 0.0
    %v1705 = vand.u32 %v1434, 4294901760
    %v1706 = vsub.f32 %v1434, %v1705
    %1707 = vmatpush1.msra.mxu0 %v1706
    %1708 = vmatprep.subr.mxu0 0.0
    %v1709 = vand.u32 %v1435, 4294901760
    %v1710 = vsub.f32 %v1435, %v1709
    %1711 = vmatpush1.msra.mxu0 %v1710
    %1712 = vmatprep.subr.mxu0 0.0
    %v1713 = vand.u32 %v1436, 4294901760
    %v1714 = vsub.f32 %v1436, %v1713
    %1715 = vmatpush1.msra.mxu0 %v1714
    %1716 = vmatprep.subr.mxu0 0.0
    %v1717 = vand.u32 %v1437, 4294901760
    %v1718 = vsub.f32 %v1437, %v1717
    %1719 = vmatpush1.msra.mxu0 %v1718
    %1720 = vmatprep.subr.mxu0 0.0
    %v1721 = vand.u32 %v1438, 4294901760
    %v1722 = vsub.f32 %v1438, %v1721
    %1723 = vmatpush1.msra.mxu0 %v1722
    %1724 = vmatprep.subr.mxu0 0.0
    %v1725 = vand.u32 %v1439, 4294901760
    %v1726 = vsub.f32 %v1439, %v1725
    %1727 = vmatpush1.msra.mxu0 %v1726
    %1728 = vmatprep.subr.mxu0 0.0
    %v1729 = vand.u32 %v1440, 4294901760
    %v1730 = vsub.f32 %v1440, %v1729
    %1731 = vmatpush1.msra.mxu0 %v1730
    %1732 = vmatprep.subr.mxu0 0.0
    %v1733 = vand.u32 %v1441, 4294901760
    %v1734 = vsub.f32 %v1441, %v1733
    %1735 = vmatpush1.msra.mxu0 %v1734
    %1736 = vmatprep.subr.mxu0 0.0
    %v1737 = vand.u32 %v1442, 4294901760
    %v1738 = vsub.f32 %v1442, %v1737
    %1739 = vmatpush1.msra.mxu0 %v1738
    %1740 = vmatprep.subr.mxu0 0.0
    %v1741 = vand.u32 %v1443, 4294901760
    %v1742 = vsub.f32 %v1443, %v1741
    %1743 = vmatpush1.msra.mxu0 %v1742
    %1744 = vmatprep.subr.mxu0 0.0
    %v1745 = vand.u32 %v1444, 4294901760
    %v1746 = vsub.f32 %v1444, %v1745
    %1747 = vmatpush1.msra.mxu0 %v1746
    %1748 = vmatprep.subr.mxu0 0.0
    %v1749 = vand.u32 %v1445, 4294901760
    %v1750 = vsub.f32 %v1445, %v1749
    %1751 = vmatpush1.msra.mxu0 %v1750
    %1752 = vmatprep.subr.mxu0 0.0
    %1753 = vmatpush1.msra.mxu0 0.0
    %1754 = vmatprep.subr.mxu0 0.0
    %1755 = vmatpush1.msra.mxu0 0.0
    %1756 = vmatprep.subr.mxu0 0.0
    %1757 = vmatpush1.msra.mxu0 0.0
    %1758 = vmatprep.subr.mxu0 0.0
    %1759 = vmatpush1.msra.mxu0 0.0
    %1760 = vmatprep.subr.mxu0 0.0
    %1761 = vmatpush1.msra.mxu0 0.0
    %1762 = vmatprep.subr.mxu0 0.0
    %1763 = vmatpush1.msra.mxu0 0.0
    %1764 = vmatprep.subr.mxu0 0.0
    %1765 = vmatpush1.msra.mxu0 0.0
    %1766 = vmatprep.subr.mxu0 0.0
    %1767 = vmatpush1.msra.mxu0 0.0
    %1768 = vmatprep.subr.mxu0 0.0
    %1769 = vmatpush1.msra.mxu0 0.0
    %1770 = vmatprep.subr.mxu0 0.0
    %1771 = vmatpush1.msra.mxu0 0.0
    %1772 = vmatprep.subr.mxu0 0.0
    %1773 = vmatpush1.msra.mxu0 0.0
    %1774 = vmatprep.subr.mxu0 0.0
    %1775 = vmatpush1.msra.mxu0 0.0
    %1776 = vmatprep.subr.mxu0 0.0
    %1777 = vmatpush1.msra.mxu0 0.0
    %1778 = vmatprep.subr.mxu0 0.0
    %1779 = vmatpush1.msra.mxu0 0.0
    %1780 = vmatprep.subr.mxu0 0.0
    %1781 = vmatpush1.msra.mxu0 0.0
    %1782 = vmatprep.subr.mxu0 0.0
    %1783 = vmatpush1.msra.mxu0 0.0
    %1784 = vmatprep.mubr.f32.mxu0 0.0
    %v1785 = vand.u32 %v1394, 4294901760
    %v1786 = vsub.f32 %v1394, %v1785
    %1787 = vmatmul.mubr.f32.gmra.mrb[0].mxu0 %v1786
    %v1788 = vpop.f32.mrb[0].mxu0
    %v1789 = vadd.f32 %v1685, %v1788
    %v1790 = vpop.f32.mrb[0].mxu0
    %1791 = vdwg.mxu0
    %1792 = vmatprep.subr.mxu0 0.0
    %v1793 = vand.u32 %v1430, 4294901760
    %1794 = vmatpush1.msra.mxu0 %v1793
    %1795 = vmatprep.subr.mxu0 0.0
    %v1796 = vand.u32 %v1431, 4294901760
    %1797 = vmatpush1.msra.mxu0 %v1796
    %1798 = vmatprep.subr.mxu0 0.0
    %v1799 = vand.u32 %v1432, 4294901760
    %1800 = vmatpush1.msra.mxu0 %v1799
    %1801 = vmatprep.subr.mxu0 0.0
    %v1802 = vand.u32 %v1433, 4294901760
    %1803 = vmatpush1.msra.mxu0 %v1802
    %1804 = vmatprep.subr.mxu0 0.0
    %v1805 = vand.u32 %v1434, 4294901760
    %1806 = vmatpush1.msra.mxu0 %v1805
    %1807 = vmatprep.subr.mxu0 0.0
    %v1808 = vand.u32 %v1435, 4294901760
    %1809 = vmatpush1.msra.mxu0 %v1808
    %1810 = vmatprep.subr.mxu0 0.0
    %v1811 = vand.u32 %v1436, 4294901760
    %1812 = vmatpush1.msra.mxu0 %v1811
    %1813 = vmatprep.subr.mxu0 0.0
    %v1814 = vand.u32 %v1437, 4294901760
    %1815 = vmatpush1.msra.mxu0 %v1814
    %1816 = vmatprep.subr.mxu0 0.0
    %v1817 = vand.u32 %v1438, 4294901760
    %1818 = vmatpush1.msra.mxu0 %v1817
    %1819 = vmatprep.subr.mxu0 0.0
    %v1820 = vand.u32 %v1439, 4294901760
    %1821 = vmatpush1.msra.mxu0 %v1820
    %1822 = vmatprep.subr.mxu0 0.0
    %v1823 = vand.u32 %v1440, 4294901760
    %1824 = vmatpush1.msra.mxu0 %v1823
    %1825 = vmatprep.subr.mxu0 0.0
    %v1826 = vand.u32 %v1441, 4294901760
    %1827 = vmatpush1.msra.mxu0 %v1826
    %1828 = vmatprep.subr.mxu0 0.0
    %v1829 = vand.u32 %v1442, 4294901760
    %1830 = vmatpush1.msra.mxu0 %v1829
    %1831 = vmatprep.subr.mxu0 0.0
    %v1832 = vand.u32 %v1443, 4294901760
    %1833 = vmatpush1.msra.mxu0 %v1832
    %1834 = vmatprep.subr.mxu0 0.0
    %v1835 = vand.u32 %v1444, 4294901760
    %1836 = vmatpush1.msra.mxu0 %v1835
    %1837 = vmatprep.subr.mxu0 0.0
    %v1838 = vand.u32 %v1445, 4294901760
    %1839 = vmatpush1.msra.mxu0 %v1838
    %1840 = vmatprep.subr.mxu0 0.0
    %1841 = vmatpush1.msra.mxu0 0.0
    %1842 = vmatprep.subr.mxu0 0.0
    %1843 = vmatpush1.msra.mxu0 0.0
    %1844 = vmatprep.subr.mxu0 0.0
    %1845 = vmatpush1.msra.mxu0 0.0
    %1846 = vmatprep.subr.mxu0 0.0
    %1847 = vmatpush1.msra.mxu0 0.0
    %1848 = vmatprep.subr.mxu0 0.0
    %1849 = vmatpush1.msra.mxu0 0.0
    %1850 = vmatprep.subr.mxu0 0.0
    %1851 = vmatpush1.msra.mxu0 0.0
    %1852 = vmatprep.subr.mxu0 0.0
    %1853 = vmatpush1.msra.mxu0 0.0
    %1854 = vmatprep.subr.mxu0 0.0
    %1855 = vmatpush1.msra.mxu0 0.0
    %1856 = vmatprep.subr.mxu0 0.0
    %1857 = vmatpush1.msra.mxu0 0.0
    %1858 = vmatprep.subr.mxu0 0.0
    %1859 = vmatpush1.msra.mxu0 0.0
    %1860 = vmatprep.subr.mxu0 0.0
    %1861 = vmatpush1.msra.mxu0 0.0
    %1862 = vmatprep.subr.mxu0 0.0
    %1863 = vmatpush1.msra.mxu0 0.0
    %1864 = vmatprep.subr.mxu0 0.0
    %1865 = vmatpush1.msra.mxu0 0.0
    %1866 = vmatprep.subr.mxu0 0.0
    %1867 = vmatpush1.msra.mxu0 0.0
    %1868 = vmatprep.subr.mxu0 0.0
    %1869 = vmatpush1.msra.mxu0 0.0
    %1870 = vmatprep.subr.mxu0 0.0
    %1871 = vmatpush1.msra.mxu0 0.0
    %1872 = vmatprep.mubr.f32.mxu0 0.0
    %v1873 = vand.u32 %v1394, 4294901760
    %v1874 = vsub.f32 %v1394, %v1873
    %v1875 = vand.u32 %v1874, 4294901760
    %1876 = vmatmul.mubr.f32.gmra.mrb[0].mxu0 %v1875
    %v1877 = vpop.f32.mrb[0].mxu0
    %v1878 = vadd.f32 %v1789, %v1877
    %v1879 = vpop.f32.mrb[0].mxu0
    %1880 = vdwg.mxu0
    %1881 = vmatprep.subr.mxu0 0.0
    %v1882 = vand.u32 %v1430, 4294901760
    %v1883 = vsub.f32 %v1430, %v1882
    %v1884 = vand.u32 %v1883, 4294901760
    %1885 = vmatpush1.msra.mxu0 %v1884
    %1886 = vmatprep.subr.mxu0 0.0
    %v1887 = vand.u32 %v1431, 4294901760
    %v1888 = vsub.f32 %v1431, %v1887
    %v1889 = vand.u32 %v1888, 4294901760
    %1890 = vmatpush1.msra.mxu0 %v1889
    %1891 = vmatprep.subr.mxu0 0.0
    %v1892 = vand.u32 %v1432, 4294901760
    %v1893 = vsub.f32 %v1432, %v1892
    %v1894 = vand.u32 %v1893, 4294901760
    %1895 = vmatpush1.msra.mxu0 %v1894
    %1896 = vmatprep.subr.mxu0 0.0
    %v1897 = vand.u32 %v1433, 4294901760
    %v1898 = vsub.f32 %v1433, %v1897
    %v1899 = vand.u32 %v1898, 4294901760
    %1900 = vmatpush1.msra.mxu0 %v1899
    %1901 = vmatprep.subr.mxu0 0.0
    %v1902 = vand.u32 %v1434, 4294901760
    %v1903 = vsub.f32 %v1434, %v1902
    %v1904 = vand.u32 %v1903, 4294901760
    %1905 = vmatpush1.msra.mxu0 %v1904
    %1906 = vmatprep.subr.mxu0 0.0
    %v1907 = vand.u32 %v1435, 4294901760
    %v1908 = vsub.f32 %v1435, %v1907
    %v1909 = vand.u32 %v1908, 4294901760
    %1910 = vmatpush1.msra.mxu0 %v1909
    %1911 = vmatprep.subr.mxu0 0.0
    %v1912 = vand.u32 %v1436, 4294901760
    %v1913 = vsub.f32 %v1436, %v1912
    %v1914 = vand.u32 %v1913, 4294901760
    %1915 = vmatpush1.msra.mxu0 %v1914
    %1916 = vmatprep.subr.mxu0 0.0
    %v1917 = vand.u32 %v1437, 4294901760
    %v1918 = vsub.f32 %v1437, %v1917
    %v1919 = vand.u32 %v1918, 4294901760
    %1920 = vmatpush1.msra.mxu0 %v1919
    %1921 = vmatprep.subr.mxu0 0.0
    %v1922 = vand.u32 %v1438, 4294901760
    %v1923 = vsub.f32 %v1438, %v1922
    %v1924 = vand.u32 %v1923, 4294901760
    %1925 = vmatpush1.msra.mxu0 %v1924
    %1926 = vmatprep.subr.mxu0 0.0
    %v1927 = vand.u32 %v1439, 4294901760
    %v1928 = vsub.f32 %v1439, %v1927
    %v1929 = vand.u32 %v1928, 4294901760
    %1930 = vmatpush1.msra.mxu0 %v1929
    %1931 = vmatprep.subr.mxu0 0.0
    %v1932 = vand.u32 %v1440, 4294901760
    %v1933 = vsub.f32 %v1440, %v1932
    %v1934 = vand.u32 %v1933, 4294901760
    %1935 = vmatpush1.msra.mxu0 %v1934
    %1936 = vmatprep.subr.mxu0 0.0
    %v1937 = vand.u32 %v1441, 4294901760
    %v1938 = vsub.f32 %v1441, %v1937
    %v1939 = vand.u32 %v1938, 4294901760
    %1940 = vmatpush1.msra.mxu0 %v1939
    %1941 = vmatprep.subr.mxu0 0.0
    %v1942 = vand.u32 %v1442, 4294901760
    %v1943 = vsub.f32 %v1442, %v1942
    %v1944 = vand.u32 %v1943, 4294901760
    %1945 = vmatpush1.msra.mxu0 %v1944
    %1946 = vmatprep.subr.mxu0 0.0
    %v1947 = vand.u32 %v1443, 4294901760
    %v1948 = vsub.f32 %v1443, %v1947
    %v1949 = vand.u32 %v1948, 4294901760
    %1950 = vmatpush1.msra.mxu0 %v1949
    %1951 = vmatprep.subr.mxu0 0.0
    %v1952 = vand.u32 %v1444, 4294901760
    %v1953 = vsub.f32 %v1444, %v1952
    %v1954 = vand.u32 %v1953, 4294901760
    %1955 = vmatpush1.msra.mxu0 %v1954
    %1956 = vmatprep.subr.mxu0 0.0
    %v1957 = vand.u32 %v1445, 4294901760
    %v1958 = vsub.f32 %v1445, %v1957
    %v1959 = vand.u32 %v1958, 4294901760
    %1960 = vmatpush1.msra.mxu0 %v1959
    %1961 = vmatprep.subr.mxu0 0.0
    %1962 = vmatpush1.msra.mxu0 0.0
    %1963 = vmatprep.subr.mxu0 0.0
    %1964 = vmatpush1.msra.mxu0 0.0
    %1965 = vmatprep.subr.mxu0 0.0
    %1966 = vmatpush1.msra.mxu0 0.0
    %1967 = vmatprep.subr.mxu0 0.0
    %1968 = vmatpush1.msra.mxu0 0.0
    %1969 = vmatprep.subr.mxu0 0.0
    %1970 = vmatpush1.msra.mxu0 0.0
    %1971 = vmatprep.subr.mxu0 0.0
    %1972 = vmatpush1.msra.mxu0 0.0
    %1973 = vmatprep.subr.mxu0 0.0
    %1974 = vmatpush1.msra.mxu0 0.0
    %1975 = vmatprep.subr.mxu0 0.0
    %1976 = vmatpush1.msra.mxu0 0.0
    %1977 = vmatprep.subr.mxu0 0.0
    %1978 = vmatpush1.msra.mxu0 0.0
    %1979 = vmatprep.subr.mxu0 0.0
    %1980 = vmatpush1.msra.mxu0 0.0
    %1981 = vmatprep.subr.mxu0 0.0
    %1982 = vmatpush1.msra.mxu0 0.0
    %1983 = vmatprep.subr.mxu0 0.0
    %1984 = vmatpush1.msra.mxu0 0.0
    %1985 = vmatprep.subr.mxu0 0.0
    %1986 = vmatpush1.msra.mxu0 0.0
    %1987 = vmatprep.subr.mxu0 0.0
    %1988 = vmatpush1.msra.mxu0 0.0
    %1989 = vmatprep.subr.mxu0 0.0
    %1990 = vmatpush1.msra.mxu0 0.0
    %1991 = vmatprep.subr.mxu0 0.0
    %1992 = vmatpush1.msra.mxu0 0.0
    %1993 = vmatprep.mubr.f32.mxu0 0.0
    %v1994 = vand.u32 %v1394, 4294901760
    %1995 = vmatmul.mubr.f32.gmra.mrb[0].mxu0 %v1994
    %v1996 = vpop.f32.mrb[0].mxu0
    %v1997 = vadd.f32 %v1878, %v1996
    %v1998 = vpop.f32.mrb[0].mxu0
    %1999 = vdwg.mxu0
    %2000 = vmatprep.subr.mxu0 0.0
    %v2001 = vand.u32 %v1430, 4294901760
    %2002 = vmatpush1.msra.mxu0 %v2001
    %2003 = vmatprep.subr.mxu0 0.0
    %v2004 = vand.u32 %v1431, 4294901760
    %2005 = vmatpush1.msra.mxu0 %v2004
    %2006 = vmatprep.subr.mxu0 0.0
    %v2007 = vand.u32 %v1432, 4294901760
    %2008 = vmatpush1.msra.mxu0 %v2007
    %2009 = vmatprep.subr.mxu0 0.0
    %v2010 = vand.u32 %v1433, 4294901760
    %2011 = vmatpush1.msra.mxu0 %v2010
    %2012 = vmatprep.subr.mxu0 0.0
    %v2013 = vand.u32 %v1434, 4294901760
    %2014 = vmatpush1.msra.mxu0 %v2013
    %2015 = vmatprep.subr.mxu0 0.0
    %v2016 = vand.u32 %v1435, 4294901760
    %2017 = vmatpush1.msra.mxu0 %v2016
    %2018 = vmatprep.subr.mxu0 0.0
    %v2019 = vand.u32 %v1436, 4294901760
    %2020 = vmatpush1.msra.mxu0 %v2019
    %2021 = vmatprep.subr.mxu0 0.0
    %v2022 = vand.u32 %v1437, 4294901760
    %2023 = vmatpush1.msra.mxu0 %v2022
    %2024 = vmatprep.subr.mxu0 0.0
    %v2025 = vand.u32 %v1438, 4294901760
    %2026 = vmatpush1.msra.mxu0 %v2025
    %2027 = vmatprep.subr.mxu0 0.0
    %v2028 = vand.u32 %v1439, 4294901760
    %2029 = vmatpush1.msra.mxu0 %v2028
    %2030 = vmatprep.subr.mxu0 0.0
    %v2031 = vand.u32 %v1440, 4294901760
    %2032 = vmatpush1.msra.mxu0 %v2031
    %2033 = vmatprep.subr.mxu0 0.0
    %v2034 = vand.u32 %v1441, 4294901760
    %2035 = vmatpush1.msra.mxu0 %v2034
    %2036 = vmatprep.subr.mxu0 0.0
    %v2037 = vand.u32 %v1442, 4294901760
    %2038 = vmatpush1.msra.mxu0 %v2037
    %2039 = vmatprep.subr.mxu0 0.0
    %v2040 = vand.u32 %v1443, 4294901760
    %2041 = vmatpush1.msra.mxu0 %v2040
    %2042 = vmatprep.subr.mxu0 0.0
    %v2043 = vand.u32 %v1444, 4294901760
    %2044 = vmatpush1.msra.mxu0 %v2043
    %2045 = vmatprep.subr.mxu0 0.0
    %v2046 = vand.u32 %v1445, 4294901760
    %2047 = vmatpush1.msra.mxu0 %v2046
    %2048 = vmatprep.subr.mxu0 0.0
    %2049 = vmatpush1.msra.mxu0 0.0
    %2050 = vmatprep.subr.mxu0 0.0
    %2051 = vmatpush1.msra.mxu0 0.0
    %2052 = vmatprep.subr.mxu0 0.0
    %2053 = vmatpush1.msra.mxu0 0.0
    %2054 = vmatprep.subr.mxu0 0.0
    %2055 = vmatpush1.msra.mxu0 0.0
    %2056 = vmatprep.subr.mxu0 0.0
    %2057 = vmatpush1.msra.mxu0 0.0
    %2058 = vmatprep.subr.mxu0 0.0
    %2059 = vmatpush1.msra.mxu0 0.0
    %2060 = vmatprep.subr.mxu0 0.0
    %2061 = vmatpush1.msra.mxu0 0.0
    %2062 = vmatprep.subr.mxu0 0.0
    %2063 = vmatpush1.msra.mxu0 0.0
    %2064 = vmatprep.subr.mxu0 0.0
    %2065 = vmatpush1.msra.mxu0 0.0
    %2066 = vmatprep.subr.mxu0 0.0
    %2067 = vmatpush1.msra.mxu0 0.0
    %2068 = vmatprep.subr.mxu0 0.0
    %2069 = vmatpush1.msra.mxu0 0.0
    %2070 = vmatprep.subr.mxu0 0.0
    %2071 = vmatpush1.msra.mxu0 0.0
    %2072 = vmatprep.subr.mxu0 0.0
    %2073 = vmatpush1.msra.mxu0 0.0
    %2074 = vmatprep.subr.mxu0 0.0
    %2075 = vmatpush1.msra.mxu0 0.0
    %2076 = vmatprep.subr.mxu0 0.0
    %2077 = vmatpush1.msra.mxu0 0.0
    %2078 = vmatprep.subr.mxu0 0.0
    %2079 = vmatpush1.msra.mxu0 0.0
    %2080 = vmatprep.mubr.f32.mxu0 0.0
    %v2081 = vand.u32 %v1394, 4294901760
    %2082 = vmatmul.mubr.f32.gmra.mrb[0].mxu0 %v2081
    %v2083 = vpop.f32.mrb[0].mxu0
    %v2084 = vadd.f32 %v1997, %v2083
    %v2085 = vpop.f32.mrb[0].mxu0
    %2086 = vdwg.mxu0
    %v2087 = vmax.f32 %v2084, 0.0
    %2088 = vadd.xlane.f32.xlu0 %v2087
    %v2089 = vpop.xlane.xlu0 %2088
    %v2090 = vrot.slane %v2089, 4
    %v2091 = vadd.f32 %v2089, %v2090
    %v2092 = vrot.slane %v2091, 2
    %v2093 = vadd.f32 %v2091, %v2092
    %v2094 = vrot.slane %v2093, 1
    %v2095 = vadd.f32 %v2093, %v2094
    %s2096 = vtos %v2095
    %v2097 = vstv %s2096
    %v2098 = vmul.f32 %v2097, %v710
    %v2099 = vsub.f32 %v2087, %v2098
    %v2100 = vmul.f32 %v2099, %v2099
    %2101 = vadd.xlane.f32.xlu0 %v2100
    %v2102 = vpop.xlane.xlu0 %2101
    %v2103 = vrot.slane %v2102, 4
    %v2104 = vadd.f32 %v2102, %v2103
    %v2105 = vrot.slane %v2104, 2
    %v2106 = vadd.f32 %v2104, %v2105
    %v2107 = vrot.slane %v2106, 1
    %v2108 = vadd.f32 %v2106, %v2107
    %s2109 = vtos %v2108
    %v2110 = vstv %s2109
    %v2111 = vmul.f32 %v2110, %v724
    %v2112 = vrsqrt.pop %v2111
    %v2113 = vmul.f32 %v2111, %v2112
    %vm2114 = vcmp.eq.f32.partialorder %v2111, inf
    %v2115 = vsel %vm2114, %v2111, %v2113
    %vm2116 = vcmp.eq.f32.partialorder %v2111, 0.0
    %v2117 = vand.u32 %v2111, 2147483648
    %v2118 = vsel %vm2116, %v2117, %v2115
    %s2119 = vtos %v2118
    %s2120 = scalar_lea.smem [#allocation9], 2
    %2121 = sst [smem:[%s2120]] %s2119
    %s2122 = scalar_lea.vmem [#allocation6], 384
    %v2123 = vld [vmem:[%s2122] sm:$0xff]
    %v2124 = vld [vmem:[%s2122 + $0x8] sm:$0xff]
    %v2125 = vld [vmem:[%s2122 + $0x10] sm:$0xff]
    %v2126 = vld [vmem:[%s2122 + $0x18] sm:$0xff]
    %v2127 = vld [vmem:[%s2122 + $0x20] sm:$0xff]
    %v2128 = vld [vmem:[%s2122 + $0x28] sm:$0xff]
    %v2129 = vld [vmem:[%s2122 + $0x30] sm:$0xff]
    %v2130 = vld [vmem:[%s2122 + $0x38] sm:$0xff]
    %v2131 = vld [vmem:[%s2122 + $0x40] sm:$0xff]
    %v2132 = vld [vmem:[%s2122 + $0x48] sm:$0xff]
    %v2133 = vld [vmem:[%s2122 + $0x50] sm:$0xff]
    %v2134 = vld [vmem:[%s2122 + $0x58] sm:$0xff]
    %v2135 = vld [vmem:[%s2122 + $0x60] sm:$0xff]
    %v2136 = vld [vmem:[%s2122 + $0x68] sm:$0xff]
    %v2137 = vld [vmem:[%s2122 + $0x70] sm:$0xff]
    %v2138 = vld [vmem:[%s2122 + $0x78] sm:$0xff]
    %2139 = vmatprep.subr.mxu0 0.0
    %v2140 = vand.u32 %v2123, 4294901760
    %2141 = vmatpush1.msra.mxu0 %v2140
    %2142 = vmatprep.subr.mxu0 0.0
    %v2143 = vand.u32 %v2124, 4294901760
    %2144 = vmatpush1.msra.mxu0 %v2143
    %2145 = vmatprep.subr.mxu0 0.0
    %v2146 = vand.u32 %v2125, 4294901760
    %2147 = vmatpush1.msra.mxu0 %v2146
    %2148 = vmatprep.subr.mxu0 0.0
    %v2149 = vand.u32 %v2126, 4294901760
    %2150 = vmatpush1.msra.mxu0 %v2149
    %2151 = vmatprep.subr.mxu0 0.0
    %v2152 = vand.u32 %v2127, 4294901760
    %2153 = vmatpush1.msra.mxu0 %v2152
    %2154 = vmatprep.subr.mxu0 0.0
    %v2155 = vand.u32 %v2128, 4294901760
    %2156 = vmatpush1.msra.mxu0 %v2155
    %2157 = vmatprep.subr.mxu0 0.0
    %v2158 = vand.u32 %v2129, 4294901760
    %2159 = vmatpush1.msra.mxu0 %v2158
    %2160 = vmatprep.subr.mxu0 0.0
    %v2161 = vand.u32 %v2130, 4294901760
    %2162 = vmatpush1.msra.mxu0 %v2161
    %2163 = vmatprep.subr.mxu0 0.0
    %v2164 = vand.u32 %v2131, 4294901760
    %2165 = vmatpush1.msra.mxu0 %v2164
    %2166 = vmatprep.subr.mxu0 0.0
    %v2167 = vand.u32 %v2132, 4294901760
    %2168 = vmatpush1.msra.mxu0 %v2167
    %2169 = vmatprep.subr.mxu0 0.0
    %v2170 = vand.u32 %v2133, 4294901760
    %2171 = vmatpush1.msra.mxu0 %v2170
    %2172 = vmatprep.subr.mxu0 0.0
    %v2173 = vand.u32 %v2134, 4294901760
    %2174 = vmatpush1.msra.mxu0 %v2173
    %2175 = vmatprep.subr.mxu0 0.0
    %v2176 = vand.u32 %v2135, 4294901760
    %2177 = vmatpush1.msra.mxu0 %v2176
    %2178 = vmatprep.subr.mxu0 0.0
    %v2179 = vand.u32 %v2136, 4294901760
    %2180 = vmatpush1.msra.mxu0 %v2179
    %2181 = vmatprep.subr.mxu0 0.0
    %v2182 = vand.u32 %v2137, 4294901760
    %2183 = vmatpush1.msra.mxu0 %v2182
    %2184 = vmatprep.subr.mxu0 0.0
    %v2185 = vand.u32 %v2138, 4294901760
    %2186 = vmatpush1.msra.mxu0 %v2185
    %2187 = vmatprep.subr.mxu0 0.0
    %2188 = vmatpush1.msra.mxu0 0.0
    %2189 = vmatprep.subr.mxu0 0.0
    %2190 = vmatpush1.msra.mxu0 0.0
    %2191 = vmatprep.subr.mxu0 0.0
    %2192 = vmatpush1.msra.mxu0 0.0
    %2193 = vmatprep.subr.mxu0 0.0
    %2194 = vmatpush1.msra.mxu0 0.0
    %2195 = vmatprep.subr.mxu0 0.0
    %2196 = vmatpush1.msra.mxu0 0.0
    %2197 = vmatprep.subr.mxu0 0.0
    %2198 = vmatpush1.msra.mxu0 0.0
    %2199 = vmatprep.subr.mxu0 0.0
    %2200 = vmatpush1.msra.mxu0 0.0
    %2201 = vmatprep.subr.mxu0 0.0
    %2202 = vmatpush1.msra.mxu0 0.0
    %2203 = vmatprep.subr.mxu0 0.0
    %2204 = vmatpush1.msra.mxu0 0.0
    %2205 = vmatprep.subr.mxu0 0.0
    %2206 = vmatpush1.msra.mxu0 0.0
    %2207 = vmatprep.subr.mxu0 0.0
    %2208 = vmatpush1.msra.mxu0 0.0
    %2209 = vmatprep.subr.mxu0 0.0
    %2210 = vmatpush1.msra.mxu0 0.0
    %2211 = vmatprep.subr.mxu0 0.0
    %2212 = vmatpush1.msra.mxu0 0.0
    %2213 = vmatprep.subr.mxu0 0.0
    %2214 = vmatpush1.msra.mxu0 0.0
    %2215 = vmatprep.subr.mxu0 0.0
    %2216 = vmatpush1.msra.mxu0 0.0
    %2217 = vmatprep.subr.mxu0 0.0
    %2218 = vmatpush1.msra.mxu0 0.0
    %2219 = vmatprep.mubr.f32.mxu0 0.0
    %v2220 = vand.u32 %v2087, 4294901760
    %v2221 = vsub.f32 %v2087, %v2220
    %v2222 = vand.u32 %v2221, 4294901760
    %v2223 = vsub.f32 %v2221, %v2222
    %v2224 = vand.u32 %v2223, 4294901760
    %2225 = vmatmul.mubr.f32.gmra.mrb[0].mxu0 %v2224
    %v2226 = vpop.f32.mrb[0].mxu0
    %v2227 = vadd.f32 0.0, %v2226
    %v2228 = vpop.f32.mrb[0].mxu0
    %2229 = vdwg.mxu0
    %2230 = vmatprep.subr.mxu0 0.0
    %v2231 = vand.u32 %v2123, 4294901760
    %v2232 = vsub.f32 %v2123, %v2231
    %v2233 = vand.u32 %v2232, 4294901760
    %v2234 = vsub.f32 %v2232, %v2233
    %v2235 = vand.u32 %v2234, 4294901760
    %2236 = vmatpush1.msra.mxu0 %v2235
    %2237 = vmatprep.subr.mxu0 0.0
    %v2238 = vand.u32 %v2124, 4294901760
    %v2239 = vsub.f32 %v2124, %v2238
    %v2240 = vand.u32 %v2239, 4294901760
    %v2241 = vsub.f32 %v2239, %v2240
    %v2242 = vand.u32 %v2241, 4294901760
    %2243 = vmatpush1.msra.mxu0 %v2242
    %2244 = vmatprep.subr.mxu0 0.0
    %v2245 = vand.u32 %v2125, 4294901760
    %v2246 = vsub.f32 %v2125, %v2245
    %v2247 = vand.u32 %v2246, 4294901760
    %v2248 = vsub.f32 %v2246, %v2247
    %v2249 = vand.u32 %v2248, 4294901760
    %2250 = vmatpush1.msra.mxu0 %v2249
    %2251 = vmatprep.subr.mxu0 0.0
    %v2252 = vand.u32 %v2126, 4294901760
    %v2253 = vsub.f32 %v2126, %v2252
    %v2254 = vand.u32 %v2253, 4294901760
    %v2255 = vsub.f32 %v2253, %v2254
    %v2256 = vand.u32 %v2255, 4294901760
    %2257 = vmatpush1.msra.mxu0 %v2256
    %2258 = vmatprep.subr.mxu0 0.0
    %v2259 = vand.u32 %v2127, 4294901760
    %v2260 = vsub.f32 %v2127, %v2259
    %v2261 = vand.u32 %v2260, 4294901760
    %v2262 = vsub.f32 %v2260, %v2261
    %v2263 = vand.u32 %v2262, 4294901760
    %2264 = vmatpush1.msra.mxu0 %v2263
    %2265 = vmatprep.subr.mxu0 0.0
    %v2266 = vand.u32 %v2128, 4294901760
    %v2267 = vsub.f32 %v2128, %v2266
    %v2268 = vand.u32 %v2267, 4294901760
    %v2269 = vsub.f32 %v2267, %v2268
    %v2270 = vand.u32 %v2269, 4294901760
    %2271 = vmatpush1.msra.mxu0 %v2270
    %2272 = vmatprep.subr.mxu0 0.0
    %v2273 = vand.u32 %v2129, 4294901760
    %v2274 = vsub.f32 %v2129, %v2273
    %v2275 = vand.u32 %v2274, 4294901760
    %v2276 = vsub.f32 %v2274, %v2275
    %v2277 = vand.u32 %v2276, 4294901760
    %2278 = vmatpush1.msra.mxu0 %v2277
    %2279 = vmatprep.subr.mxu0 0.0
    %v2280 = vand.u32 %v2130, 4294901760
    %v2281 = vsub.f32 %v2130, %v2280
    %v2282 = vand.u32 %v2281, 4294901760
    %v2283 = vsub.f32 %v2281, %v2282
    %v2284 = vand.u32 %v2283, 4294901760
    %2285 = vmatpush1.msra.mxu0 %v2284
    %2286 = vmatprep.subr.mxu0 0.0
    %v2287 = vand.u32 %v2131, 4294901760
    %v2288 = vsub.f32 %v2131, %v2287
    %v2289 = vand.u32 %v2288, 4294901760
    %v2290 = vsub.f32 %v2288, %v2289
    %v2291 = vand.u32 %v2290, 4294901760
    %2292 = vmatpush1.msra.mxu0 %v2291
    %2293 = vmatprep.subr.mxu0 0.0
    %v2294 = vand.u32 %v2132, 4294901760
    %v2295 = vsub.f32 %v2132, %v2294
    %v2296 = vand.u32 %v2295, 4294901760
    %v2297 = vsub.f32 %v2295, %v2296
    %v2298 = vand.u32 %v2297, 4294901760
    %2299 = vmatpush1.msra.mxu0 %v2298
    %2300 = vmatprep.subr.mxu0 0.0
    %v2301 = vand.u32 %v2133, 4294901760
    %v2302 = vsub.f32 %v2133, %v2301
    %v2303 = vand.u32 %v2302, 4294901760
    %v2304 = vsub.f32 %v2302, %v2303
    %v2305 = vand.u32 %v2304, 4294901760
    %2306 = vmatpush1.msra.mxu0 %v2305
    %2307 = vmatprep.subr.mxu0 0.0
    %v2308 = vand.u32 %v2134, 4294901760
    %v2309 = vsub.f32 %v2134, %v2308
    %v2310 = vand.u32 %v2309, 4294901760
    %v2311 = vsub.f32 %v2309, %v2310
    %v2312 = vand.u32 %v2311, 4294901760
    %2313 = vmatpush1.msra.mxu0 %v2312
    %2314 = vmatprep.subr.mxu0 0.0
    %v2315 = vand.u32 %v2135, 4294901760
    %v2316 = vsub.f32 %v2135, %v2315
    %v2317 = vand.u32 %v2316, 4294901760
    %v2318 = vsub.f32 %v2316, %v2317
    %v2319 = vand.u32 %v2318, 4294901760
    %2320 = vmatpush1.msra.mxu0 %v2319
    %2321 = vmatprep.subr.mxu0 0.0
    %v2322 = vand.u32 %v2136, 4294901760
    %v2323 = vsub.f32 %v2136, %v2322
    %v2324 = vand.u32 %v2323, 4294901760
    %v2325 = vsub.f32 %v2323, %v2324
    %v2326 = vand.u32 %v2325, 4294901760
    %2327 = vmatpush1.msra.mxu0 %v2326
    %2328 = vmatprep.subr.mxu0 0.0
    %v2329 = vand.u32 %v2137, 4294901760
    %v2330 = vsub.f32 %v2137, %v2329
    %v2331 = vand.u32 %v2330, 4294901760
    %v2332 = vsub.f32 %v2330, %v2331
    %v2333 = vand.u32 %v2332, 4294901760
    %2334 = vmatpush1.msra.mxu0 %v2333
    %2335 = vmatprep.subr.mxu0 0.0
    %v2336 = vand.u32 %v2138, 4294901760
    %v2337 = vsub.f32 %v2138, %v2336
    %v2338 = vand.u32 %v2337, 4294901760
    %v2339 = vsub.f32 %v2337, %v2338
    %v2340 = vand.u32 %v2339, 4294901760
    %2341 = vmatpush1.msra.mxu0 %v2340
    %2342 = vmatprep.subr.mxu0 0.0
    %2343 = vmatpush1.msra.mxu0 0.0
    %2344 = vmatprep.subr.mxu0 0.0
    %2345 = vmatpush1.msra.mxu0 0.0
    %2346 = vmatprep.subr.mxu0 0.0
    %2347 = vmatpush1.msra.mxu0 0.0
    %2348 = vmatprep.subr.mxu0 0.0
    %2349 = vmatpush1.msra.mxu0 0.0
    %2350 = vmatprep.subr.mxu0 0.0
    %2351 = vmatpush1.msra.mxu0 0.0
    %2352 = vmatprep.subr.mxu0 0.0
    %2353 = vmatpush1.msra.mxu0 0.0
    %2354 = vmatprep.subr.mxu0 0.0
    %2355 = vmatpush1.msra.mxu0 0.0
    %2356 = vmatprep.subr.mxu0 0.0
    %2357 = vmatpush1.msra.mxu0 0.0
    %2358 = vmatprep.subr.mxu0 0.0
    %2359 = vmatpush1.msra.mxu0 0.0
    %2360 = vmatprep.subr.mxu0 0.0
    %2361 = vmatpush1.msra.mxu0 0.0
    %2362 = vmatprep.subr.mxu0 0.0
    %2363 = vmatpush1.msra.mxu0 0.0
    %2364 = vmatprep.subr.mxu0 0.0
    %2365 = vmatpush1.msra.mxu0 0.0
    %2366 = vmatprep.subr.mxu0 0.0
    %2367 = vmatpush1.msra.mxu0 0.0
    %2368 = vmatprep.subr.mxu0 0.0
    %2369 = vmatpush1.msra.mxu0 0.0
    %2370 = vmatprep.subr.mxu0 0.0
    %2371 = vmatpush1.msra.mxu0 0.0
    %2372 = vmatprep.subr.mxu0 0.0
    %2373 = vmatpush1.msra.mxu0 0.0
    %2374 = vmatprep.mubr.f32.mxu0 0.0
    %v2375 = vand.u32 %v2087, 4294901760
    %2376 = vmatmul.mubr.f32.gmra.mrb[0].mxu0 %v2375
    %v2377 = vpop.f32.mrb[0].mxu0
    %v2378 = vadd.f32 %v2227, %v2377
    %v2379 = vpop.f32.mrb[0].mxu0
    %2380 = vdwg.mxu0
    %2381 = vmatprep.subr.mxu0 0.0
    %v2382 = vand.u32 %v2123, 4294901760
    %v2383 = vsub.f32 %v2123, %v2382
    %2384 = vmatpush1.msra.mxu0 %v2383
    %2385 = vmatprep.subr.mxu0 0.0
    %v2386 = vand.u32 %v2124, 4294901760
    %v2387 = vsub.f32 %v2124, %v2386
    %2388 = vmatpush1.msra.mxu0 %v2387
    %2389 = vmatprep.subr.mxu0 0.0
    %v2390 = vand.u32 %v2125, 4294901760
    %v2391 = vsub.f32 %v2125, %v2390
    %2392 = vmatpush1.msra.mxu0 %v2391
    %2393 = vmatprep.subr.mxu0 0.0
    %v2394 = vand.u32 %v2126, 4294901760
    %v2395 = vsub.f32 %v2126, %v2394
    %2396 = vmatpush1.msra.mxu0 %v2395
    %2397 = vmatprep.subr.mxu0 0.0
    %v2398 = vand.u32 %v2127, 4294901760
    %v2399 = vsub.f32 %v2127, %v2398
    %2400 = vmatpush1.msra.mxu0 %v2399
    %2401 = vmatprep.subr.mxu0 0.0
    %v2402 = vand.u32 %v2128, 4294901760
    %v2403 = vsub.f32 %v2128, %v2402
    %2404 = vmatpush1.msra.mxu0 %v2403
    %2405 = vmatprep.subr.mxu0 0.0
    %v2406 = vand.u32 %v2129, 4294901760
    %v2407 = vsub.f32 %v2129, %v2406
    %2408 = vmatpush1.msra.mxu0 %v2407
    %2409 = vmatprep.subr.mxu0 0.0
    %v2410 = vand.u32 %v2130, 4294901760
    %v2411 = vsub.f32 %v2130, %v2410
    %2412 = vmatpush1.msra.mxu0 %v2411
    %2413 = vmatprep.subr.mxu0 0.0
    %v2414 = vand.u32 %v2131, 4294901760
    %v2415 = vsub.f32 %v2131, %v2414
    %2416 = vmatpush1.msra.mxu0 %v2415
    %2417 = vmatprep.subr.mxu0 0.0
    %v2418 = vand.u32 %v2132, 4294901760
    %v2419 = vsub.f32 %v2132, %v2418
    %2420 = vmatpush1.msra.mxu0 %v2419
    %2421 = vmatprep.subr.mxu0 0.0
    %v2422 = vand.u32 %v2133, 4294901760
    %v2423 = vsub.f32 %v2133, %v2422
    %2424 = vmatpush1.msra.mxu0 %v2423
    %2425 = vmatprep.subr.mxu0 0.0
    %v2426 = vand.u32 %v2134, 4294901760
    %v2427 = vsub.f32 %v2134, %v2426
    %2428 = vmatpush1.msra.mxu0 %v2427
    %2429 = vmatprep.subr.mxu0 0.0
    %v2430 = vand.u32 %v2135, 4294901760
    %v2431 = vsub.f32 %v2135, %v2430
    %2432 = vmatpush1.msra.mxu0 %v2431
    %2433 = vmatprep.subr.mxu0 0.0
    %v2434 = vand.u32 %v2136, 4294901760
    %v2435 = vsub.f32 %v2136, %v2434
    %2436 = vmatpush1.msra.mxu0 %v2435
    %2437 = vmatprep.subr.mxu0 0.0
    %v2438 = vand.u32 %v2137, 4294901760
    %v2439 = vsub.f32 %v2137, %v2438
    %2440 = vmatpush1.msra.mxu0 %v2439
    %2441 = vmatprep.subr.mxu0 0.0
    %v2442 = vand.u32 %v2138, 4294901760
    %v2443 = vsub.f32 %v2138, %v2442
    %2444 = vmatpush1.msra.mxu0 %v2443
    %2445 = vmatprep.subr.mxu0 0.0
    %2446 = vmatpush1.msra.mxu0 0.0
    %2447 = vmatprep.subr.mxu0 0.0
    %2448 = vmatpush1.msra.mxu0 0.0
    %2449 = vmatprep.subr.mxu0 0.0
    %2450 = vmatpush1.msra.mxu0 0.0
    %2451 = vmatprep.subr.mxu0 0.0
    %2452 = vmatpush1.msra.mxu0 0.0
    %2453 = vmatprep.subr.mxu0 0.0
    %2454 = vmatpush1.msra.mxu0 0.0
    %2455 = vmatprep.subr.mxu0 0.0
    %2456 = vmatpush1.msra.mxu0 0.0
    %2457 = vmatprep.subr.mxu0 0.0
    %2458 = vmatpush1.msra.mxu0 0.0
    %2459 = vmatprep.subr.mxu0 0.0
    %2460 = vmatpush1.msra.mxu0 0.0
    %2461 = vmatprep.subr.mxu0 0.0
    %2462 = vmatpush1.msra.mxu0 0.0
    %2463 = vmatprep.subr.mxu0 0.0
    %2464 = vmatpush1.msra.mxu0 0.0
    %2465 = vmatprep.subr.mxu0 0.0
    %2466 = vmatpush1.msra.mxu0 0.0
    %2467 = vmatprep.subr.mxu0 0.0
    %2468 = vmatpush1.msra.mxu0 0.0
    %2469 = vmatprep.subr.mxu0 0.0
    %2470 = vmatpush1.msra.mxu0 0.0
    %2471 = vmatprep.subr.mxu0 0.0
    %2472 = vmatpush1.msra.mxu0 0.0
    %2473 = vmatprep.subr.mxu0 0.0
    %2474 = vmatpush1.msra.mxu0 0.0
    %2475 = vmatprep.subr.mxu0 0.0
    %2476 = vmatpush1.msra.mxu0 0.0
    %2477 = vmatprep.mubr.f32.mxu0 0.0
    %v2478 = vand.u32 %v2087, 4294901760
    %v2479 = vsub.f32 %v2087, %v2478
    %2480 = vmatmul.mubr.f32.gmra.mrb[0].mxu0 %v2479
    %v2481 = vpop.f32.mrb[0].mxu0
    %v2482 = vadd.f32 %v2378, %v2481
    %v2483 = vpop.f32.mrb[0].mxu0
    %2484 = vdwg.mxu0
    %2485 = vmatprep.subr.mxu0 0.0
    %v2486 = vand.u32 %v2123, 4294901760
    %2487 = vmatpush1.msra.mxu0 %v2486
    %2488 = vmatprep.subr.mxu0 0.0
    %v2489 = vand.u32 %v2124, 4294901760
    %2490 = vmatpush1.msra.mxu0 %v2489
    %2491 = vmatprep.subr.mxu0 0.0
    %v2492 = vand.u32 %v2125, 4294901760
    %2493 = vmatpush1.msra.mxu0 %v2492
    %2494 = vmatprep.subr.mxu0 0.0
    %v2495 = vand.u32 %v2126, 4294901760
    %2496 = vmatpush1.msra.mxu0 %v2495
    %2497 = vmatprep.subr.mxu0 0.0
    %v2498 = vand.u32 %v2127, 4294901760
    %2499 = vmatpush1.msra.mxu0 %v2498
    %2500 = vmatprep.subr.mxu0 0.0
    %v2501 = vand.u32 %v2128, 4294901760
    %2502 = vmatpush1.msra.mxu0 %v2501
    %2503 = vmatprep.subr.mxu0 0.0
    %v2504 = vand.u32 %v2129, 4294901760
    %2505 = vmatpush1.msra.mxu0 %v2504
    %2506 = vmatprep.subr.mxu0 0.0
    %v2507 = vand.u32 %v2130, 4294901760
    %2508 = vmatpush1.msra.mxu0 %v2507
    %2509 = vmatprep.subr.mxu0 0.0
    %v2510 = vand.u32 %v2131, 4294901760
    %2511 = vmatpush1.msra.mxu0 %v2510
    %2512 = vmatprep.subr.mxu0 0.0
    %v2513 = vand.u32 %v2132, 4294901760
    %2514 = vmatpush1.msra.mxu0 %v2513
    %2515 = vmatprep.subr.mxu0 0.0
    %v2516 = vand.u32 %v2133, 4294901760
    %2517 = vmatpush1.msra.mxu0 %v2516
    %2518 = vmatprep.subr.mxu0 0.0
    %v2519 = vand.u32 %v2134, 4294901760
    %2520 = vmatpush1.msra.mxu0 %v2519
    %2521 = vmatprep.subr.mxu0 0.0
    %v2522 = vand.u32 %v2135, 4294901760
    %2523 = vmatpush1.msra.mxu0 %v2522
    %2524 = vmatprep.subr.mxu0 0.0
    %v2525 = vand.u32 %v2136, 4294901760
    %2526 = vmatpush1.msra.mxu0 %v2525
    %2527 = vmatprep.subr.mxu0 0.0
    %v2528 = vand.u32 %v2137, 4294901760
    %2529 = vmatpush1.msra.mxu0 %v2528
    %2530 = vmatprep.subr.mxu0 0.0
    %v2531 = vand.u32 %v2138, 4294901760
    %2532 = vmatpush1.msra.mxu0 %v2531
    %2533 = vmatprep.subr.mxu0 0.0
    %2534 = vmatpush1.msra.mxu0 0.0
    %2535 = vmatprep.subr.mxu0 0.0
    %2536 = vmatpush1.msra.mxu0 0.0
    %2537 = vmatprep.subr.mxu0 0.0
    %2538 = vmatpush1.msra.mxu0 0.0
    %2539 = vmatprep.subr.mxu0 0.0
    %2540 = vmatpush1.msra.mxu0 0.0
    %2541 = vmatprep.subr.mxu0 0.0
    %2542 = vmatpush1.msra.mxu0 0.0
    %2543 = vmatprep.subr.mxu0 0.0
    %2544 = vmatpush1.msra.mxu0 0.0
    %2545 = vmatprep.subr.mxu0 0.0
    %2546 = vmatpush1.msra.mxu0 0.0
    %2547 = vmatprep.subr.mxu0 0.0
    %2548 = vmatpush1.msra.mxu0 0.0
    %2549 = vmatprep.subr.mxu0 0.0
    %2550 = vmatpush1.msra.mxu0 0.0
    %2551 = vmatprep.subr.mxu0 0.0
    %2552 = vmatpush1.msra.mxu0 0.0
    %2553 = vmatprep.subr.mxu0 0.0
    %2554 = vmatpush1.msra.mxu0 0.0
    %2555 = vmatprep.subr.mxu0 0.0
    %2556 = vmatpush1.msra.mxu0 0.0
    %2557 = vmatprep.subr.mxu0 0.0
    %2558 = vmatpush1.msra.mxu0 0.0
    %2559 = vmatprep.subr.mxu0 0.0
    %2560 = vmatpush1.msra.mxu0 0.0
    %2561 = vmatprep.subr.mxu0 0.0
    %2562 = vmatpush1.msra.mxu0 0.0
    %2563 = vmatprep.subr.mxu0 0.0
    %2564 = vmatpush1.msra.mxu0 0.0
    %2565 = vmatprep.mubr.f32.mxu0 0.0
    %v2566 = vand.u32 %v2087, 4294901760
    %v2567 = vsub.f32 %v2087, %v2566
    %v2568 = vand.u32 %v2567, 4294901760
    %2569 = vmatmul.mubr.f32.gmra.mrb[0].mxu0 %v2568
    %v2570 = vpop.f32.mrb[0].mxu0
    %v2571 = vadd.f32 %v2482, %v2570
    %v2572 = vpop.f32.mrb[0].mxu0
    %2573 = vdwg.mxu0
    %2574 = vmatprep.subr.mxu0 0.0
    %v2575 = vand.u32 %v2123, 4294901760
    %v2576 = vsub.f32 %v2123, %v2575
    %v2577 = vand.u32 %v2576, 4294901760
    %2578 = vmatpush1.msra.mxu0 %v2577
    %2579 = vmatprep.subr.mxu0 0.0
    %v2580 = vand.u32 %v2124, 4294901760
    %v2581 = vsub.f32 %v2124, %v2580
    %v2582 = vand.u32 %v2581, 4294901760
    %2583 = vmatpush1.msra.mxu0 %v2582
    %2584 = vmatprep.subr.mxu0 0.0
    %v2585 = vand.u32 %v2125, 4294901760
    %v2586 = vsub.f32 %v2125, %v2585
    %v2587 = vand.u32 %v2586, 4294901760
    %2588 = vmatpush1.msra.mxu0 %v2587
    %2589 = vmatprep.subr.mxu0 0.0
    %v2590 = vand.u32 %v2126, 4294901760
    %v2591 = vsub.f32 %v2126, %v2590
    %v2592 = vand.u32 %v2591, 4294901760
    %2593 = vmatpush1.msra.mxu0 %v2592
    %2594 = vmatprep.subr.mxu0 0.0
    %v2595 = vand.u32 %v2127, 4294901760
    %v2596 = vsub.f32 %v2127, %v2595
    %v2597 = vand.u32 %v2596, 4294901760
    %2598 = vmatpush1.msra.mxu0 %v2597
    %2599 = vmatprep.subr.mxu0 0.0
    %v2600 = vand.u32 %v2128, 4294901760
    %v2601 = vsub.f32 %v2128, %v2600
    %v2602 = vand.u32 %v2601, 4294901760
    %2603 = vmatpush1.msra.mxu0 %v2602
    %2604 = vmatprep.subr.mxu0 0.0
    %v2605 = vand.u32 %v2129, 4294901760
    %v2606 = vsub.f32 %v2129, %v2605
    %v2607 = vand.u32 %v2606, 4294901760
    %2608 = vmatpush1.msra.mxu0 %v2607
    %2609 = vmatprep.subr.mxu0 0.0
    %v2610 = vand.u32 %v2130, 4294901760
    %v2611 = vsub.f32 %v2130, %v2610
    %v2612 = vand.u32 %v2611, 4294901760
    %2613 = vmatpush1.msra.mxu0 %v2612
    %2614 = vmatprep.subr.mxu0 0.0
    %v2615 = vand.u32 %v2131, 4294901760
    %v2616 = vsub.f32 %v2131, %v2615
    %v2617 = vand.u32 %v2616, 4294901760
    %2618 = vmatpush1.msra.mxu0 %v2617
    %2619 = vmatprep.subr.mxu0 0.0
    %v2620 = vand.u32 %v2132, 4294901760
    %v2621 = vsub.f32 %v2132, %v2620
    %v2622 = vand.u32 %v2621, 4294901760
    %2623 = vmatpush1.msra.mxu0 %v2622
    %2624 = vmatprep.subr.mxu0 0.0
    %v2625 = vand.u32 %v2133, 4294901760
    %v2626 = vsub.f32 %v2133, %v2625
    %v2627 = vand.u32 %v2626, 4294901760
    %2628 = vmatpush1.msra.mxu0 %v2627
    %2629 = vmatprep.subr.mxu0 0.0
    %v2630 = vand.u32 %v2134, 4294901760
    %v2631 = vsub.f32 %v2134, %v2630
    %v2632 = vand.u32 %v2631, 4294901760
    %2633 = vmatpush1.msra.mxu0 %v2632
    %2634 = vmatprep.subr.mxu0 0.0
    %v2635 = vand.u32 %v2135, 4294901760
    %v2636 = vsub.f32 %v2135, %v2635
    %v2637 = vand.u32 %v2636, 4294901760
    %2638 = vmatpush1.msra.mxu0 %v2637
    %2639 = vmatprep.subr.mxu0 0.0
    %v2640 = vand.u32 %v2136, 4294901760
    %v2641 = vsub.f32 %v2136, %v2640
    %v2642 = vand.u32 %v2641, 4294901760
    %2643 = vmatpush1.msra.mxu0 %v2642
    %2644 = vmatprep.subr.mxu0 0.0
    %v2645 = vand.u32 %v2137, 4294901760
    %v2646 = vsub.f32 %v2137, %v2645
    %v2647 = vand.u32 %v2646, 4294901760
    %2648 = vmatpush1.msra.mxu0 %v2647
    %2649 = vmatprep.subr.mxu0 0.0
    %v2650 = vand.u32 %v2138, 4294901760
    %v2651 = vsub.f32 %v2138, %v2650
    %v2652 = vand.u32 %v2651, 4294901760
    %2653 = vmatpush1.msra.mxu0 %v2652
    %2654 = vmatprep.subr.mxu0 0.0
    %2655 = vmatpush1.msra.mxu0 0.0
    %2656 = vmatprep.subr.mxu0 0.0
    %2657 = vmatpush1.msra.mxu0 0.0
    %2658 = vmatprep.subr.mxu0 0.0
    %2659 = vmatpush1.msra.mxu0 0.0
    %2660 = vmatprep.subr.mxu0 0.0
    %2661 = vmatpush1.msra.mxu0 0.0
    %2662 = vmatprep.subr.mxu0 0.0
    %2663 = vmatpush1.msra.mxu0 0.0
    %2664 = vmatprep.subr.mxu0 0.0
    %2665 = vmatpush1.msra.mxu0 0.0
    %2666 = vmatprep.subr.mxu0 0.0
    %2667 = vmatpush1.msra.mxu0 0.0
    %2668 = vmatprep.subr.mxu0 0.0
    %2669 = vmatpush1.msra.mxu0 0.0
    %2670 = vmatprep.subr.mxu0 0.0
    %2671 = vmatpush1.msra.mxu0 0.0
    %2672 = vmatprep.subr.mxu0 0.0
    %2673 = vmatpush1.msra.mxu0 0.0
    %2674 = vmatprep.subr.mxu0 0.0
    %2675 = vmatpush1.msra.mxu0 0.0
    %2676 = vmatprep.subr.mxu0 0.0
    %2677 = vmatpush1.msra.mxu0 0.0
    %2678 = vmatprep.subr.mxu0 0.0
    %2679 = vmatpush1.msra.mxu0 0.0
    %2680 = vmatprep.subr.mxu0 0.0
    %2681 = vmatpush1.msra.mxu0 0.0
    %2682 = vmatprep.subr.mxu0 0.0
    %2683 = vmatpush1.msra.mxu0 0.0
    %2684 = vmatprep.subr.mxu0 0.0
    %2685 = vmatpush1.msra.mxu0 0.0
    %2686 = vmatprep.mubr.f32.mxu0 0.0
    %v2687 = vand.u32 %v2087, 4294901760
    %2688 = vmatmul.mubr.f32.gmra.mrb[0].mxu0 %v2687
    %v2689 = vpop.f32.mrb[0].mxu0
    %v2690 = vadd.f32 %v2571, %v2689
    %v2691 = vpop.f32.mrb[0].mxu0
    %2692 = vdwg.mxu0
    %2693 = vmatprep.subr.mxu0 0.0
    %v2694 = vand.u32 %v2123, 4294901760
    %2695 = vmatpush1.msra.mxu0 %v2694
    %2696 = vmatprep.subr.mxu0 0.0
    %v2697 = vand.u32 %v2124, 4294901760
    %2698 = vmatpush1.msra.mxu0 %v2697
    %2699 = vmatprep.subr.mxu0 0.0
    %v2700 = vand.u32 %v2125, 4294901760
    %2701 = vmatpush1.msra.mxu0 %v2700
    %2702 = vmatprep.subr.mxu0 0.0
    %v2703 = vand.u32 %v2126, 4294901760
    %2704 = vmatpush1.msra.mxu0 %v2703
    %2705 = vmatprep.subr.mxu0 0.0
    %v2706 = vand.u32 %v2127, 4294901760
    %2707 = vmatpush1.msra.mxu0 %v2706
    %2708 = vmatprep.subr.mxu0 0.0
    %v2709 = vand.u32 %v2128, 4294901760
    %2710 = vmatpush1.msra.mxu0 %v2709
    %2711 = vmatprep.subr.mxu0 0.0
    %v2712 = vand.u32 %v2129, 4294901760
    %2713 = vmatpush1.msra.mxu0 %v2712
    %2714 = vmatprep.subr.mxu0 0.0
    %v2715 = vand.u32 %v2130, 4294901760
    %2716 = vmatpush1.msra.mxu0 %v2715
    %2717 = vmatprep.subr.mxu0 0.0
    %v2718 = vand.u32 %v2131, 4294901760
    %2719 = vmatpush1.msra.mxu0 %v2718
    %2720 = vmatprep.subr.mxu0 0.0
    %v2721 = vand.u32 %v2132, 4294901760
    %2722 = vmatpush1.msra.mxu0 %v2721
    %2723 = vmatprep.subr.mxu0 0.0
    %v2724 = vand.u32 %v2133, 4294901760
    %2725 = vmatpush1.msra.mxu0 %v2724
    %2726 = vmatprep.subr.mxu0 0.0
    %v2727 = vand.u32 %v2134, 4294901760
    %2728 = vmatpush1.msra.mxu0 %v2727
    %2729 = vmatprep.subr.mxu0 0.0
    %v2730 = vand.u32 %v2135, 4294901760
    %2731 = vmatpush1.msra.mxu0 %v2730
    %2732 = vmatprep.subr.mxu0 0.0
    %v2733 = vand.u32 %v2136, 4294901760
    %2734 = vmatpush1.msra.mxu0 %v2733
    %2735 = vmatprep.subr.mxu0 0.0
    %v2736 = vand.u32 %v2137, 4294901760
    %2737 = vmatpush1.msra.mxu0 %v2736
    %2738 = vmatprep.subr.mxu0 0.0
    %v2739 = vand.u32 %v2138, 4294901760
    %2740 = vmatpush1.msra.mxu0 %v2739
    %2741 = vmatprep.subr.mxu0 0.0
    %2742 = vmatpush1.msra.mxu0 0.0
    %2743 = vmatprep.subr.mxu0 0.0
    %2744 = vmatpush1.msra.mxu0 0.0
    %2745 = vmatprep.subr.mxu0 0.0
    %2746 = vmatpush1.msra.mxu0 0.0
    %2747 = vmatprep.subr.mxu0 0.0
    %2748 = vmatpush1.msra.mxu0 0.0
    %2749 = vmatprep.subr.mxu0 0.0
    %2750 = vmatpush1.msra.mxu0 0.0
    %2751 = vmatprep.subr.mxu0 0.0
    %2752 = vmatpush1.msra.mxu0 0.0
    %2753 = vmatprep.subr.mxu0 0.0
    %2754 = vmatpush1.msra.mxu0 0.0
    %2755 = vmatprep.subr.mxu0 0.0
    %2756 = vmatpush1.msra.mxu0 0.0
    %2757 = vmatprep.subr.mxu0 0.0
    %2758 = vmatpush1.msra.mxu0 0.0
    %2759 = vmatprep.subr.mxu0 0.0
    %2760 = vmatpush1.msra.mxu0 0.0
    %2761 = vmatprep.subr.mxu0 0.0
    %2762 = vmatpush1.msra.mxu0 0.0
    %2763 = vmatprep.subr.mxu0 0.0
    %2764 = vmatpush1.msra.mxu0 0.0
    %2765 = vmatprep.subr.mxu0 0.0
    %2766 = vmatpush1.msra.mxu0 0.0
    %2767 = vmatprep.subr.mxu0 0.0
    %2768 = vmatpush1.msra.mxu0 0.0
    %2769 = vmatprep.subr.mxu0 0.0
    %2770 = vmatpush1.msra.mxu0 0.0
    %2771 = vmatprep.subr.mxu0 0.0
    %2772 = vmatpush1.msra.mxu0 0.0
    %2773 = vmatprep.mubr.f32.mxu0 0.0
    %v2774 = vand.u32 %v2087, 4294901760
    %2775 = vmatmul.mubr.f32.gmra.mrb[0].mxu0 %v2774
    %v2776 = vpop.f32.mrb[0].mxu0
    %v2777 = vadd.f32 %v2690, %v2776
    %v2778 = vpop.f32.mrb[0].mxu0
    %2779 = vdwg.mxu0
    %v2780 = vmax.f32 %v2777, 0.0
    %2781 = vadd.xlane.f32.xlu0 %v2780
    %v2782 = vpop.xlane.xlu0 %2781
    %v2783 = vrot.slane %v2782, 4
    %v2784 = vadd.f32 %v2782, %v2783
    %v2785 = vrot.slane %v2784, 2
    %v2786 = vadd.f32 %v2784, %v2785
    %v2787 = vrot.slane %v2786, 1
    %v2788 = vadd.f32 %v2786, %v2787
    %s2789 = vtos %v2788
    %v2790 = vstv %s2789
    %v2791 = vmul.f32 %v2790, %v710
    %v2792 = vsub.f32 %v2780, %v2791
    %v2793 = vmul.f32 %v2792, %v2792
    %2794 = vadd.xlane.f32.xlu0 %v2793
    %v2795 = vpop.xlane.xlu0 %2794
    %v2796 = vrot.slane %v2795, 4
    %v2797 = vadd.f32 %v2795, %v2796
    %v2798 = vrot.slane %v2797, 2
    %v2799 = vadd.f32 %v2797, %v2798
    %v2800 = vrot.slane %v2799, 1
    %v2801 = vadd.f32 %v2799, %v2800
    %s2802 = vtos %v2801
    %v2803 = vstv %s2802
    %v2804 = vmul.f32 %v2803, %v724
    %v2805 = vrsqrt.pop %v2804
    %v2806 = vmul.f32 %v2804, %v2805
    %vm2807 = vcmp.eq.f32.partialorder %v2804, inf
    %v2808 = vsel %vm2807, %v2804, %v2806
    %vm2809 = vcmp.eq.f32.partialorder %v2804, 0.0
    %v2810 = vand.u32 %v2804, 2147483648
    %v2811 = vsel %vm2809, %v2810, %v2808
    %s2812 = vtos %v2811
    %s2813 = scalar_lea.smem [#allocation9], 3
    %2814 = sst [smem:[%s2813]] %s2812
    %2815 = vst [vmem:[#allocation8] sm:$0xff] %v2780
    // Predicated region
    $region18: #{mlp_forward.1} parent=1 // pred_check
      _
    $region19: #{mlp_forward.1} parent=1 // pred_check_branch
      %2817 = sbr.rel (0) target = $region21
    $region20: #{mlp_forward.1} parent=1 // pred_region
      %s2819 = ssub.s32 128, 128
      %2820 = vsyncadd [#allocation4], %s2819
      %s2822 = sshll.u32 [#allocation8], 4
      %s2823 = int_to_ptr.vmem [resolvable:$true] %s2822
      %2825 = dma.vmem_to_hbm [thread:$0]  %s2823, 128, %s2, [#allocation4]
    $region21: #{mlp_forward.1} parent=1 // pred_fallthru
      _
    // Predicated region
    $region22: #{mlp_forward.1} parent=1 // pred_check
      _
    $region23: #{mlp_forward.1} parent=1 // pred_check_branch
      %2827 = sbr.rel (0) target = $region25
    $region24: #{mlp_forward.1} parent=1 // pred_region
      %s2829 = ssub.s32 16, 16
      %2830 = vsyncadd [#allocation5], %s2829
      %2833 = dma.smem_to_hbm [#allocation9], 16, %s3, [#allocation5]
    $region25: #{mlp_forward.1} parent=1 // pred_fallthru
      _
    // Predicated region
    $region26: #{mlp_forward.1} parent=1 // pred_check
      _
    $region27: #{mlp_forward.1} parent=1 // pred_check_branch
      %2835 = sbr.rel (0) target = $region29
    $region28: #{mlp_forward.1} parent=1 // pred_region
      %2836 = dma.done [#allocation4], 128
    $region29: #{mlp_forward.1} parent=1 // pred_fallthru
      _
    // Predicated region
    $region30: #{mlp_forward.1} parent=1 // pred_check
      _
    $region31: #{mlp_forward.1} parent=1 // pred_check_branch
      %2838 = sbr.rel (0) target = $region33
    $region32: #{mlp_forward.1} parent=1 // pred_region
      %2839 = dma.done [#allocation5], 16
    $region33: #{mlp_forward.1} parent=1 // pred_fallthru
      _
    %2840 = sfence
    %2841 = vsyncpa [#allocation3], 1
    %2842 = vsyncpa [#allocation7], 1
    %2843 = vsyncpa [#allocation4], 1
    %2844 = vsyncpa [#allocation5], 1

</llo_original>
